<compile_context>
chip_gen: v5e
topology: v5e:2x2
jax: 0.10.0
libtpu: 0.0.40
codegen_flags: <defaults>
</compile_context>

<pallas_src>
import jax
import jax.numpy as jnp
from jax.experimental import pallas as pl
from jax.experimental.pallas import tpu as pltpu


_TM = 128  # row-tile; Np is padded to a multiple of this (also keeps 2Np % 128 == 0)


def _round_up(v, m):
    return ((v + m - 1) // m) * m


# ---------------------------------------------------------------------------
# Pallas kernel: one row-tile of   out = tanh(ops_tile @ rhs + add)
# Used twice: stage 1-2 (base layers) and stage 3 (deep layers).
# ---------------------------------------------------------------------------

def _tanh_matmul_kernel(ops_ref, rhs_ref, add_ref, out_ref):
    """ops_ref: [TM, K] bf16, rhs_ref: [K, W] bf16 (resident),
    add_ref: [TM, W] or [1, W] f32, out_ref: [TM, W] f32."""
    acc = jnp.dot(ops_ref[...], rhs_ref[...], preferred_element_type=jnp.float32)
    out_ref[...] = jnp.tanh(acc + add_ref[...])


def _tiled_tanh_matmul(ops, rhs, add, *, ops_cols, tm=_TM):
    """Row-tiled tanh(ops[:, :ops_cols] @ rhs + add).

    ops : [Np, 4Np] bf16   (only the first `ops_cols` columns are streamed)
    rhs : [ops_cols, W] bf16, resident across grid steps (constant index_map)
    add : [Np, W] f32 (row-tiled) or [1, W] f32 (resident bias)
    """
    np_rows = ops.shape[0]
    out_cols = rhs.shape[1]
    grid = (np_rows // tm,)

    if add.shape[0] == 1:
        add_spec = pl.BlockSpec((1, out_cols), lambda i: (0, 0))
    else:
        add_spec = pl.BlockSpec((tm, out_cols), lambda i: (i, 0))

    return pl.pallas_call(
        _tanh_matmul_kernel,
        out_shape=jax.ShapeDtypeStruct((np_rows, out_cols), jnp.float32),
        grid=grid,
        in_specs=[
            pl.BlockSpec((tm, ops_cols), lambda i: (i, 0)),   # operator row tile
            pl.BlockSpec(rhs.shape, lambda i: (0, 0)),        # resident RHS
            add_spec,
        ],
        out_specs=pl.BlockSpec((tm, out_cols), lambda i: (i, 0)),
        compiler_params=pltpu.CompilerParams(
            dimension_semantics=("parallel",)),
    )(ops, rhs, add)


# ---------------------------------------------------------------------------
# Forward pass
# ---------------------------------------------------------------------------

def network_forward(fused, x, ops, pool):
    """Full Network forward.

    fused : dict from fuse_params (weights in f32 except where noted)
    x     : [N, F] f32 node features (unpadded)
    ops   : [Np, 4Np] bf16 stacked operator from build_graph_operators
    pool  : [B, Np] f32 mean-pool matrix from build_graph_operators
    """
    np_rows = ops.shape[0]
    n, f = x.shape
    h2 = fused["w_x"].shape[1]          # 2 * hid_feats
    o2 = fused["w_deep"].shape[1]       # 2 * out_feats
    o = o2 // 2

    x_pad = jnp.pad(x.astype(jnp.float32), ((0, np_rows - n), (0, 0)))

    # ---- prologue (plain JAX, O(N*F*H)): XW and per-node additive term -----
    w_xw = fused["w_xw"].reshape(4, f, h2)
    xw = jnp.einsum("nf,kfh->knh", x_pad, w_xw).reshape(4 * np_rows, h2)
    xw = xw.astype(jnp.bfloat16)                                # [4Np, 2H]
    xwx = x_pad @ fused["w_x"] + fused["b_base"]                # [Np, 2H] f32

    # ---- stage 1-2: both SignedLayerBase layers, one tiled matmul ----------
    h0 = _tiled_tanh_matmul(ops, xw, xwx, ops_cols=4 * np_rows)  # [Np, 2H] f32

    # ---- stage 3: both SignedLayerDeep layers, one tiled matmul ------------
    hg = h0 @ fused["w_deep"]                                    # [Np, 2O] f32
    zer = jnp.zeros((np_rows, o), jnp.float32)
    rhs_deep = jnp.concatenate(
        [jnp.concatenate([hg[:, :o], zer], axis=1),
         jnp.concatenate([zer, hg[:, o:]], axis=1)], axis=0).astype(jnp.bfloat16)
    h1 = _tiled_tanh_matmul(ops, rhs_deep, fused["b_deep"],
                            ops_cols=2 * np_rows)                # [Np, 2O] f32

    # ---- stage 4: scatter_mean(batch) + fc + log_softmax (tiny, plain JAX) -
    pooled = pool @ h1                                           # [B, 2O] f32
    logits = pooled @ fused["w_fc"] + fused["b_fc"]              # [B, 4]
    return jax.nn.log_softmax(logits, axis=1)


# ---------------------------------------------------------------------------
# Plain-JAX glue: edge lists -> dense operators (built ONCE, reused per call)
# ---------------------------------------------------------------------------

def dense_base_adj_plus_eye(link, n, np_rows):
    """scatter_add(x[col], row) + x  ==  (A + I) @ x with A[row, col] += 1."""
    row, col = link[0], link[1]
    a = jnp.zeros((np_rows, np_rows), jnp.float32).at[row, col].add(1.0)
    ids = jnp.arange(n)
    return a.at[ids, ids].add(1.0)


def gcn_norm_dense(link, n, np_rows):
    """PyG GCNConv normalization, densified: Ahat = D^{-1/2} (A + I) D^{-1/2}.

    A[dst, src] (messages flow src -> dst); D is the aggregation-side degree
    including self-loops, matching torch_geometric's gcn_norm. Padded nodes
    (>= n) get no self-loop and stay all-zero.
    """
    src, dst = link[0], link[1]
    a = jnp.zeros((np_rows, np_rows), jnp.float32).at[dst, src].add(1.0)
    ids = jnp.arange(n)
    a = a.at[ids, ids].add(1.0)
    deg = jnp.sum(a, axis=1)
    dinv = jnp.where(deg > 0.0, jax.lax.rsqrt(deg), 0.0)
    return dinv[:, None] * a * dinv[None, :]


def mean_pool_matrix(batch, num_graphs, n, np_rows):
    """scatter_mean over batch -> P[b, i] = (batch[i]==b)/count[b], zero-padded."""
    onehot = (batch[None, :] == jnp.arange(num_graphs)[:, None]).astype(jnp.float32)
    counts = jnp.maximum(jnp.sum(onehot, axis=1, keepdims=True), 1.0)
    pool = onehot / counts
    return jnp.pad(pool, ((0, 0), (0, np_rows - n)))


def build_graph_operators(pos_link, neg_link, batch, num_graphs, n, tile=_TM):
    """Stacked [Np, 4Np] bf16 operator (columns: Ahat_pos|Ahat_neg|A_pos+I|A_neg+I)
    and the [B, Np] f32 mean-pool matrix.  Np = n rounded up to `tile`."""
    np_rows = _round_up(max(n, tile), tile)
    ops = jnp.concatenate(
        [gcn_norm_dense(pos_link, n, np_rows),
         gcn_norm_dense(neg_link, n, np_rows),
         dense_base_adj_plus_eye(pos_link, n, np_rows),
         dense_base_adj_plus_eye(neg_link, n, np_rows)],
        axis=1).astype(jnp.bfloat16)
    pool = mean_pool_matrix(batch, num_graphs, n, np_rows)
    return ops, pool


# ---------------------------------------------------------------------------
# Parameters
# ---------------------------------------------------------------------------

def init_params(key, in_feats, hid_feats, out_feats):
    assert hid_feats == out_feats, (
        "Network.fc = Linear(out_feats + hid_feats, 4) only matches the "
        "concatenated deep output (2*out_feats) when hid_feats == out_feats")

    def nrm(k, shape, scale=0.1):
        return (scale * jax.random.normal(k, shape)).astype(jnp.float32)

    keys = jax.random.split(key, 16)
    p = {}
    # SignedLayerBase (pos / neg): weight [2F, H] split top/bot, bias [H],
    # conv1 = GCNConv(F, H): Wg [F, H], bg [H]   (conv2 of base layers unused)
    for i, name in enumerate(["pos_base", "neg_base"]):
        k = keys[5 * i:5 * i + 5]
        p[name] = dict(
            w_top=nrm(k[0], (in_feats, hid_feats)),
            w_bot=nrm(k[1], (in_feats, hid_feats)),
            b=nrm(k[2], (1, hid_feats)),
            wg=nrm(k[3], (in_feats, hid_feats)),
            bg=nrm(k[4], (1, hid_feats)),
        )
    # SignedLayerDeep (pos / neg): conv2 = GCNConv(2H, O)
    for i, name in enumerate(["pos_deep", "neg_deep"]):
        k = keys[10 + 2 * i:10 + 2 * i + 2]
        p[name] = dict(
            wg=nrm(k[0], (2 * hid_feats, out_feats)),
            bg=nrm(k[1], (1, out_feats)),
        )
    # fc = Linear(out_feats + hid_feats, 4)
    p["fc"] = dict(w=nrm(keys[14], (out_feats + hid_feats, 4)),
                   b=nrm(keys[15], (1, 4)))
    return p


def fuse_params(params, in_feats, hid_feats, out_feats):
    """Host-side weight fusion into the block layouts the kernels expect."""
    f, h = in_feats, hid_feats
    pb, nb = params["pos_base"], params["neg_base"]
    zf = jnp.zeros((f, h), jnp.float32)
    # Row-block order must match ops column order [Ahat_pos|Ahat_neg|A_pos+I|A_neg+I]
    w_xw = jnp.concatenate([
        jnp.concatenate([pb["wg"], zf], axis=1),        # Ahat_pos slab
        jnp.concatenate([zf, nb["wg"]], axis=1),        # Ahat_neg slab
        jnp.concatenate([pb["w_top"], zf], axis=1),     # (A_pos + I) slab
        jnp.concatenate([zf, nb["w_top"]], axis=1),     # (A_neg + I) slab
    ], axis=0)                                          # [4F, 2H]
    w_x = jnp.concatenate([pb["w_bot"], nb["w_bot"]], axis=1)        # [F, 2H]
    b_base = jnp.concatenate([pb["b"] + pb["bg"], nb["b"] + nb["bg"]], axis=1)

    pd, nd = params["pos_deep"], params["neg_deep"]
    w_deep = jnp.concatenate([pd["wg"], nd["wg"]], axis=1)           # [2H, 2O]
    b_deep = jnp.concatenate([pd["bg"], nd["bg"]], axis=1)           # [1, 2O]

    return dict(
        w_xw=w_xw, w_x=w_x, b_base=b_base,
        w_deep=w_deep, b_deep=b_deep,
        w_fc=params["fc"]["w"], b_fc=params["fc"]["b"],
    )


# ---------------------------------------------------------------------------
# Pure-JAX reference (f32) for correctness checking
# ---------------------------------------------------------------------------

def reference_forward(params, x, pos_link, neg_link, batch, num_graphs):
    n = x.shape[0]
    ap_pos = dense_base_adj_plus_eye(pos_link, n, n)
    ap_neg = dense_base_adj_plus_eye(neg_link, n, n)
    ah_pos = gcn_norm_dense(pos_link, n, n)
    ah_neg = gcn_norm_dense(neg_link, n, n)
    pool = mean_pool_matrix(batch, num_graphs, n, n)

    def base(pp, a_plus_i, a_hat):
        aggx = a_plus_i @ x                         # scatter_add(x[col],row) + x
        w = jnp.concatenate([pp["w_top"], pp["w_bot"]], axis=0)
        out = jnp.concatenate([aggx, x], axis=1) @ w + pp["b"]
        out = out + a_hat @ (x @ pp["wg"]) + pp["bg"]
        return jnp.tanh(out)

    h0 = jnp.concatenate([base(params["pos_base"], ap_pos, ah_pos),
                          base(params["neg_base"], ap_neg, ah_neg)], axis=1)

    def deep(pp, a_hat):
        return jnp.tanh(a_hat @ (h0 @ pp["wg"]) + pp["bg"])

    h1 = jnp.concatenate([deep(params["pos_deep"], ah_pos),
                          deep(params["neg_deep"], ah_neg)], axis=1)
    logits = pool @ h1 @ params["fc"]["w"] + params["fc"]["b"]
    return jax.nn.log_softmax(logits, axis=1)


# ---------------------------------------------------------------------------
# Example run
# ---------------------------------------------------------------------------

if __name__ == "__main__":
    N, IN_FEATS, HID, OUT = 200, 8, 16, 16   # hid == out required by fc dims
    B = 2                                    # graphs in the batch
    EP, EN = 400, 400

    key = jax.random.PRNGKey(0)
    k_x, k_p1, k_p2, k_n1, k_n2, k_params = jax.random.split(key, 6)

    x = jax.random.normal(k_x, (N, IN_FEATS), dtype=jnp.float32)

    def make_edges(ks, kd, e):
        src = jax.random.randint(ks, (e,), 0, N)
        off = jax.random.randint(kd, (e,), 1, N)   # no self-loops
        dst = (src + off) % N
        return jnp.stack([src, dst]).astype(jnp.int32)

    pos_link = make_edges(k_p1, k_p2, EP)      # [2, EP]
    neg_link = make_edges(k_n1, k_n2, EN)      # [2, EN]
    batch = jnp.repeat(jnp.arange(B, dtype=jnp.int32), N // B)  # [N]

    params = init_params(k_params, IN_FEATS, HID, OUT)
    fused = fuse_params(params, IN_FEATS, HID, OUT)

    # Graph operators built ONCE (bf16), reused across forward calls;
    # no per-call cast of the N^2-scale operator inside network_forward.
    ops, pool = build_graph_operators(pos_link, neg_link, batch, B, N)

    fwd = jax.jit(network_forward)
    out = fwd(fused, x, ops, pool)
    out = jax.block_until_ready(out)

    assert out.shape == (B, 4)
    # rows of log_softmax must exp-sum to 1
    assert bool(jnp.all(jnp.abs(jnp.sum(jnp.exp(out), axis=1) - 1.0) < 1e-3))
    # tiled bf16-operator kernels must match the f32 pure-JAX reference
    ref = reference_forward(params, x, pos_link, neg_link, batch, B)
    max_err = float(jnp.max(jnp.abs(out - ref)))
    assert max_err < 5e-2, f"max abs error vs reference: {max_err}"
    print("KERNEL_OK")
</pallas_src>

<mosaic_0001>
module attributes {stable_mosaic.version = 11 : i64} {
  func.func @_tanh_matmul_kernel(%arg0: i32, %arg1: memref<128x1024xbf16, #tpu.memory_space<vmem>>, %arg2: memref<1024x32xbf16, #tpu.memory_space<vmem>>, %arg3: memref<128x32xf32, #tpu.memory_space<vmem>>, %arg4: memref<128x32xf32, #tpu.memory_space<vmem>>) attributes {dimension_semantics = [#tpu.dimension_semantics<parallel>], iteration_bounds = array<i64: 2>, scalar_prefetch = 0 : i64, scratch_operands = 0 : i64, tpu.core_type = #tpu.core_type<tc>, window_params = [{transform_indices = @transform_0, window_bounds = array<i64: 128, 1024>}, {pipeline_mode = #tpu.pipeline_mode<synchronous>, transform_indices = @transform_1, window_bounds = array<i64: 1024, 32>}, {transform_indices = @transform_2, window_bounds = array<i64: 128, 32>}, {transform_indices = @transform_3, window_bounds = array<i64: 128, 32>}]} {
    %c0 = arith.constant 0 : index
    %c0_0 = arith.constant 0 : index
    %0 = vector.load %arg1[%c0, %c0_0] : memref<128x1024xbf16, #tpu.memory_space<vmem>>, vector<128x1024xbf16>
    %c0_1 = arith.constant 0 : index
    %c0_2 = arith.constant 0 : index
    %1 = vector.load %arg2[%c0_1, %c0_2] : memref<1024x32xbf16, #tpu.memory_space<vmem>>, vector<1024x32xbf16>
    %cst = arith.constant dense<0.000000e+00> : vector<128x32xf32>
    %2 = tpu.matmul %0, %1, %cst {dimension_numbers = #tpu.dot_dimension_numbers<[1], [0], [0], [1], [0, 0, 1, 1], [], []>} : vector<128x1024xbf16>, vector<1024x32xbf16>, vector<128x32xf32> -> vector<128x32xf32>
    %c0_3 = arith.constant 0 : index
    %c0_4 = arith.constant 0 : index
    %3 = vector.load %arg3[%c0_3, %c0_4] : memref<128x32xf32, #tpu.memory_space<vmem>>, vector<128x32xf32>
    %4 = arith.addf %2, %3 : vector<128x32xf32>
    %5 = math.tanh %4 : vector<128x32xf32>
    %c0_5 = arith.constant 0 : index
    %c0_6 = arith.constant 0 : index
    %6 = vector.load %arg4[%c0_5, %c0_6] : memref<128x32xf32, #tpu.memory_space<vmem>>, vector<128x32xf32>
    tpu.vector_store %arg4[%c0_5, %c0_6], %5 {strides = array<i32>} : memref<128x32xf32, #tpu.memory_space<vmem>>, vector<128x32xf32>,
    return
  }
  func.func @transform_0(%arg0: i32) -> (i32, i32) {
    %c0_i32 = arith.constant 0 : i32
    %c0_i32_0 = arith.constant 0 : i32
    return %arg0, %c0_i32 : i32, i32
  }
  func.func @transform_1(%arg0: i32) -> (i32, i32) {
    %c0_i32 = arith.constant 0 : i32
    %c0_i32_0 = arith.constant 0 : i32
    %c0_i32_1 = arith.constant 0 : i32
    return %c0_i32, %c0_i32_0 : i32, i32
  }
  func.func @transform_2(%arg0: i32) -> (i32, i32) {
    %c0_i32 = arith.constant 0 : i32
    %c0_i32_0 = arith.constant 0 : i32
    return %arg0, %c0_i32 : i32, i32
  }
  func.func @transform_3(%arg0: i32) -> (i32, i32) {
    %c0_i32 = arith.constant 0 : i32
    %c0_i32_0 = arith.constant 0 : i32
    return %arg0, %c0_i32 : i32, i32
  }
}

module attributes {stable_mosaic.version = 11 : i64} {
  func.func @_tanh_matmul_kernel(%arg0: i32, %arg1: memref<128x512xbf16, #tpu.memory_space<vmem>>, %arg2: memref<512x32xbf16, #tpu.memory_space<vmem>>, %arg3: memref<1x32xf32, #tpu.memory_space<vmem>>, %arg4: memref<128x32xf32, #tpu.memory_space<vmem>>) attributes {dimension_semantics = [#tpu.dimension_semantics<parallel>], iteration_bounds = array<i64: 2>, scalar_prefetch = 0 : i64, scratch_operands = 0 : i64, tpu.core_type = #tpu.core_type<tc>, window_params = [{transform_indices = @transform_0, window_bounds = array<i64: 128, 512>}, {pipeline_mode = #tpu.pipeline_mode<synchronous>, transform_indices = @transform_1, window_bounds = array<i64: 512, 32>}, {pipeline_mode = #tpu.pipeline_mode<synchronous>, transform_indices = @transform_2, window_bounds = array<i64: 1, 32>}, {transform_indices = @transform_3, window_bounds = array<i64: 128, 32>}]} {
    %c0 = arith.constant 0 : index
    %c0_0 = arith.constant 0 : index
    %0 = vector.load %arg1[%c0, %c0_0] : memref<128x512xbf16, #tpu.memory_space<vmem>>, vector<128x512xbf16>
    %c0_1 = arith.constant 0 : index
    %c0_2 = arith.constant 0 : index
    %1 = vector.load %arg2[%c0_1, %c0_2] : memref<512x32xbf16, #tpu.memory_space<vmem>>, vector<512x32xbf16>
    %cst = arith.constant dense<0.000000e+00> : vector<128x32xf32>
    %2 = tpu.matmul %0, %1, %cst {dimension_numbers = #tpu.dot_dimension_numbers<[1], [0], [0], [1], [0, 0, 1, 1], [], []>} : vector<128x512xbf16>, vector<512x32xbf16>, vector<128x32xf32> -> vector<128x32xf32>
    %c0_3 = arith.constant 0 : index
    %c0_4 = arith.constant 0 : index
    %3 = vector.load %arg3[%c0_3, %c0_4] : memref<1x32xf32, #tpu.memory_space<vmem>>, vector<1x32xf32>
    %4 = vector.broadcast %3 : vector<1x32xf32> to vector<128x32xf32>
    %5 = arith.addf %2, %4 : vector<128x32xf32>
    %6 = math.tanh %5 : vector<128x32xf32>
    %c0_5 = arith.constant 0 : index
    %c0_6 = arith.constant 0 : index
    %7 = vector.load %arg4[%c0_5, %c0_6] : memref<128x32xf32, #tpu.memory_space<vmem>>, vector<128x32xf32>
    tpu.vector_store %arg4[%c0_5, %c0_6], %6 {strides = array<i32>} : memref<128x32xf32, #tpu.memory_space<vmem>>, vector<128x32xf32>,
    return
  }
  func.func @transform_0(%arg0: i32) -> (i32, i32) {
    %c0_i32 = arith.constant 0 : i32
    %c0_i32_0 = arith.constant 0 : i32
    return %arg0, %c0_i32 : i32, i32
  }
  func.func @transform_1(%arg0: i32) -> (i32, i32) {
    %c0_i32 = arith.constant 0 : i32
    %c0_i32_0 = arith.constant 0 : i32
    %c0_i32_1 = arith.constant 0 : i32
    return %c0_i32, %c0_i32_0 : i32, i32
  }
  func.func @transform_2(%arg0: i32) -> (i32, i32) {
    %c0_i32 = arith.constant 0 : i32
    %c0_i32_0 = arith.constant 0 : i32
    %c0_i32_1 = arith.constant 0 : i32
    return %c0_i32, %c0_i32_0 : i32, i32
  }
  func.func @transform_3(%arg0: i32) -> (i32, i32) {
    %c0_i32 = arith.constant 0 : i32
    %c0_i32_0 = arith.constant 0 : i32
    return %arg0, %c0_i32 : i32, i32
  }
}

</mosaic_0001>

<llo_original>
// kernel: network_forward.2
$region0: #{network_forward.2}
  #allocation0 [shape = 'u32[]', space=smem, size = 0x4, offset = 0x4, fixed_abs, tag = 'smem constant byte address 0x4 - core index']
  #allocation1 [shape = 'u32[72,128]{1,0:T(1,128)}', space=vmem, size = 0x9000, scoped, tag = 'internal scratch']
  %s0 = inlined_call_operand.vmem [shape: bf16[256,1024], index: 0, kind: input, shape index: {}]
  %s1 = inlined_call_operand.vmem [shape: bf16[1024,32], index: 1, kind: input, shape index: {}]
  %s2 = inlined_call_operand.vmem [shape: f32[256,32], index: 2, kind: input, shape index: {}]
  %s3 = inlined_call_operand.vmem [shape: f32[256,32], index: 3, kind: output, shape index: {}]
  %s4 = sld [smem:[#allocation0]]
  $region45: #{network_forward.2} parent=0
    _
  %s6 = ssub.s32 1, %s4
  %s7 = scalar_select 0, %s6, %s4
  loop: start=0, step=1, limit=4
  $region2: #{network_forward.2} parent=0 // loop_pre_header
    _
  $region3: #{network_forward.2} parent=0 // loop_header
    %s9 = sphi 0, %s13
    %p10 = scmp.ge.s32.totalorder %s9, 4
    %s19 = sphi 0, %s21
    %s22 = sphi 0, %s19
    %s23 = sphi 0, %s22
    %s39 = sphi 0, %s23
    %s43 = sphi 0, %s43
    %s45 = sphi 0, %s43
    %s46 = sphi 0, %s45
    %s60 = sphi 0, %s46
    %s66 = sphi 0, %s68
    %s69 = sphi 0, %s66
    %s70 = sphi 0, %s69
    %s86 = sphi 0, %s70
    %s92 = sphi 0, %s94
    %s95 = sphi 0, %s92
    %s96 = sphi 0, %s95
    %s112 = sphi 0, %s96
  $region4: #{network_forward.2} parent=0 // loop_header_branch
    %12 = sbr.rel (%p10) target = $region8
  $region5: #{network_forward.2} parent=0 // loop_body
    %s14 = ssub.s32 %s9, 1
    %s15 = ssub.s32 %s9, 2
    %s16 = sadd.s32 %s9, 1
    %s17 = ssub.s32 %s9, %s16
    %p18 = scmp.eq.s32.totalorder %s17, 0
    %s20 = sadd.s32 %s19, 1
    %s21 = scalar_select %p18, %s19, %s20
    %p24 = pneg %p18
    %p25 = scmp.eq.s32.totalorder %s9, 1
    %p26 = por %p24, %p25
    %p27 = scmp.ne.s32.totalorder %s19, %s22
    %p28 = scmp.eq.s32.totalorder %s9, 0
    %p29 = por %p27, %p28
    %p30 = scmp.ne.s32.totalorder %s19, %s22
    %p31 = scmp.eq.s32.totalorder %s14, 1
    %p32 = por %p30, %p31
    %p33 = scmp.ne.s32.totalorder %s22, %s23
    %p34 = scmp.eq.s32.totalorder %s14, 0
    %p35 = por %p33, %p34
    %p36 = scmp.ne.s32.totalorder %s22, %s23
    %p37 = scmp.eq.s32.totalorder %s15, 1
    %p38 = por %p36, %p37
    %p40 = scmp.ne.s32.totalorder %s23, %s39
    %p41 = scmp.eq.s32.totalorder %s15, 0
    %p42 = por %p40, %p41
    %s44 = sadd.s32 %s43, 1
    %p47 = scmp.eq.s32.totalorder %s9, 1
    %p48 = scmp.ne.s32.totalorder %s43, %s45
    %p49 = scmp.eq.s32.totalorder %s9, 0
    %p50 = por %p48, %p49
    %p51 = scmp.ne.s32.totalorder %s43, %s45
    %p52 = scmp.eq.s32.totalorder %s14, 1
    %p53 = por %p51, %p52
    %p54 = scmp.ne.s32.totalorder %s45, %s46
    %p55 = scmp.eq.s32.totalorder %s14, 0
    %p56 = por %p54, %p55
    %p57 = scmp.ne.s32.totalorder %s45, %s46
    %p58 = scmp.eq.s32.totalorder %s15, 1
    %p59 = por %p57, %p58
    %p61 = scmp.ne.s32.totalorder %s46, %s60
    %p62 = scmp.eq.s32.totalorder %s15, 0
    %p63 = por %p61, %p62
    %s64 = ssub.s32 %s9, %s16
    %p65 = scmp.eq.s32.totalorder %s64, 0
    %s67 = sadd.s32 %s66, 1
    %s68 = scalar_select %p65, %s66, %s67
    %p71 = pneg %p65
    %p72 = scmp.eq.s32.totalorder %s9, 1
    %p73 = por %p71, %p72
    %p74 = scmp.ne.s32.totalorder %s66, %s69
    %p75 = scmp.eq.s32.totalorder %s9, 0
    %p76 = por %p74, %p75
    %p77 = scmp.ne.s32.totalorder %s66, %s69
    %p78 = scmp.eq.s32.totalorder %s14, 1
    %p79 = por %p77, %p78
    %p80 = scmp.ne.s32.totalorder %s69, %s70
    %p81 = scmp.eq.s32.totalorder %s14, 0
    %p82 = por %p80, %p81
    %p83 = scmp.ne.s32.totalorder %s69, %s70
    %p84 = scmp.eq.s32.totalorder %s15, 1
    %p85 = por %p83, %p84
    %p87 = scmp.ne.s32.totalorder %s70, %s86
    %p88 = scmp.eq.s32.totalorder %s15, 0
    %p89 = por %p87, %p88
    %s90 = ssub.s32 %s9, %s16
    %p91 = scmp.eq.s32.totalorder %s90, 0
    %s93 = sadd.s32 %s92, 1
    %s94 = scalar_select %p91, %s92, %s93
    %p97 = pneg %p91
    %p98 = scmp.eq.s32.totalorder %s9, 1
    %p99 = por %p97, %p98
    %p100 = scmp.ne.s32.totalorder %s92, %s95
    %p101 = scmp.eq.s32.totalorder %s9, 0
    %p102 = por %p100, %p101
    %p103 = scmp.ne.s32.totalorder %s92, %s95
    %p104 = scmp.eq.s32.totalorder %s14, 1
    %p105 = por %p103, %p104
    %p106 = scmp.ne.s32.totalorder %s95, %s96
    %p107 = scmp.eq.s32.totalorder %s14, 0
    %p108 = por %p106, %p107
    %p109 = scmp.ne.s32.totalorder %s95, %s96
    %p110 = scmp.eq.s32.totalorder %s15, 1
    %p111 = por %p109, %p110
    %p113 = scmp.ne.s32.totalorder %s96, %s112
    %p114 = scmp.eq.s32.totalorder %s15, 0
    %p115 = por %p113, %p114
    %p116 = scmp.le.s32.totalorder 1, %s9
    %p117 = scmp.lt.s32.totalorder %s9, 3
    %p118 = pnand %p116, %p117
    %p119 = pneg %p118
    // Predicated region
    $region9: #{network_forward.2} parent=5 // pred_check
      _
    $region10: #{network_forward.2} parent=5 // pred_check_branch
      %121 = sbr.rel (%p118) target = $region12
    $region11: #{network_forward.2} parent=5 // pred_region
      %s122 = ssub.s32 %s9, 1
      // Predicated region
      $region13: #{network_forward.2} parent=11 // pred_check
        %p123 = pneg %p56
      $region14: #{network_forward.2} parent=11 // pred_check_branch
        %125 = sbr.rel (%p123) target = $region16
      $region15: #{network_forward.2} parent=11 // pred_region
        _
      $region16: #{network_forward.2} parent=11 // pred_fallthru
        _
    $region12: #{network_forward.2} parent=5 // pred_fallthru
      _
    %p126 = scmp.lt.s32.totalorder %s9, 2
    // Predicated region
    $region17: #{network_forward.2} parent=5 // pred_check
      %p127 = pneg %p126
    $region18: #{network_forward.2} parent=5 // pred_check_branch
      %129 = sbr.rel (%p127) target = $region20
    $region19: #{network_forward.2} parent=5 // pred_region
      // Predicated region
      $region21: #{network_forward.2} parent=19 // pred_check
        %p130 = pneg %p29
      $region22: #{network_forward.2} parent=19 // pred_check_branch
        %132 = sbr.rel (%p130) target = $region24
      $region23: #{network_forward.2} parent=19 // pred_region
        %s133 = smul.u32 16, %s9
        %p134 = scmp.lt.s32.totalorder %s133, 31
        %s135 = scalar_select %p134, %s133, 31
        %s136 = smul.addr %s135, 8
        %s137 = smul.addr %s136, 4
        %s138 = scalar_lea.vmem %s0, %s137
        %s139 = smul.u32 16, %s9
      $region24: #{network_forward.2} parent=19 // pred_fallthru
        _
      // Predicated region
      $region25: #{network_forward.2} parent=19 // pred_check
        %p140 = pneg %p76
      $region26: #{network_forward.2} parent=19 // pred_check_branch
        %142 = sbr.rel (%p140) target = $region28
      $region27: #{network_forward.2} parent=19 // pred_region
        %s143 = smul.u32 16, %s9
        %p144 = scmp.lt.s32.totalorder %s143, 31
        %s145 = scalar_select %p144, %s143, 31
        %s146 = smul.addr %s145, 8
        %s147 = scalar_lea.vmem %s2, %s146
        %s148 = smul.u32 16, %s9
      $region28: #{network_forward.2} parent=19 // pred_fallthru
        _
    $region20: #{network_forward.2} parent=5 // pred_fallthru
      _
    %p149 = scmp.le.s32.totalorder 1, %s9
    %p150 = scmp.lt.s32.totalorder %s9, 3
    %p151 = pnand %p149, %p150
    %p152 = pneg %p151
    // Predicated region
    $region29: #{network_forward.2} parent=5 // pred_check
      _
    $region30: #{network_forward.2} parent=5 // pred_check_branch
      %154 = sbr.rel (%p151) target = $region32
    $region31: #{network_forward.2} parent=5 // pred_region
      %s155 = ssub.s32 %s9, 1
      %s156 = smul.u32 16, %s14
      %p157 = scmp.lt.s32.totalorder %s156, 31
      %s158 = scalar_select %p157, %s156, 31
      %s159 = smul.addr %s158, 8
      %s160 = smul.addr %s159, 4
      %s161 = scalar_lea.vmem %s0, %s160
      %p162 = pneg %p35
      %p163 = pneg %p32
      %p164 = pneg %p56
      %p165 = pneg %p53
      %s166 = smul.u32 16, %s14
      %p167 = scmp.lt.s32.totalorder %s166, 31
      %s168 = scalar_select %p167, %s166, 31
      %s169 = smul.addr %s168, 8
      %s170 = scalar_lea.vmem %s2, %s169
      %p171 = pneg %p82
      %p172 = pneg %p79
      %p173 = pneg %p108
      %p174 = pneg %p105
      %s175 = smul.u32 16, %s14
      %p176 = scmp.lt.s32.totalorder %s175, 31
      %s177 = scalar_select %p176, %s175, 31
      %s178 = smul.addr %s177, 8
      %s179 = scalar_lea.vmem %s3, %s178
      %s180 = smul.u32 16, %s14
      %p181 = scmp.lt.s32.totalorder %s180, 31
      %s182 = scalar_select %p181, %s180, 31
      %s183 = smul.addr %s182, 8
      %s184 = smul.addr %s183, 4
      %s185 = scalar_lea.vmem %s0, %s184
      %s186 = smul.u32 16, %s14
      %s187 = smul.u32 16, %s14
      %p188 = scmp.lt.s32.totalorder %s187, 31
      %s189 = scalar_select %p188, %s187, 31
      %s190 = smul.addr %s189, 8
      %s191 = scalar_lea.vmem %s2, %s190
      %s192 = smul.u32 16, %s14
      %s193 = smul.u32 16, %s14
      %p194 = scmp.lt.s32.totalorder %s193, 31
      %s195 = scalar_select %p194, %s193, 31
      %s196 = smul.addr %s195, 8
      %s197 = scalar_lea.vmem %s3, %s196
      %s198 = smul.u32 16, %s14
      %v199 = vld [vmem:[%s185] sm:$0xff]
      %v200 = vld [vmem:[%s185 + $0x8] sm:$0xff]
      %v201 = vld [vmem:[%s185 + $0x10] sm:$0xff]
      %v202 = vld [vmem:[%s185 + $0x18] sm:$0xff]
      %v203 = vld [vmem:[%s185 + $0x20] sm:$0xff]
      %v204 = vld [vmem:[%s185 + $0x28] sm:$0xff]
      %v205 = vld [vmem:[%s185 + $0x30] sm:$0xff]
      %v206 = vld [vmem:[%s185 + $0x38] sm:$0xff]
      %v207 = vld [vmem:[%s185 + $0x40] sm:$0xff]
      %v208 = vld [vmem:[%s185 + $0x48] sm:$0xff]
      %v209 = vld [vmem:[%s185 + $0x50] sm:$0xff]
      %v210 = vld [vmem:[%s185 + $0x58] sm:$0xff]
      %v211 = vld [vmem:[%s185 + $0x60] sm:$0xff]
      %v212 = vld [vmem:[%s185 + $0x68] sm:$0xff]
      %v213 = vld [vmem:[%s185 + $0x70] sm:$0xff]
      %v214 = vld [vmem:[%s185 + $0x78] sm:$0xff]
      %v215 = vld [vmem:[%s185 + $0x80] sm:$0xff]
      %v216 = vld [vmem:[%s185 + $0x88] sm:$0xff]
      %v217 = vld [vmem:[%s185 + $0x90] sm:$0xff]
      %v218 = vld [vmem:[%s185 + $0x98] sm:$0xff]
      %v219 = vld [vmem:[%s185 + $0xa0] sm:$0xff]
      %v220 = vld [vmem:[%s185 + $0xa8] sm:$0xff]
      %v221 = vld [vmem:[%s185 + $0xb0] sm:$0xff]
      %v222 = vld [vmem:[%s185 + $0xb8] sm:$0xff]
      %v223 = vld [vmem:[%s185 + $0xc0] sm:$0xff]
      %v224 = vld [vmem:[%s185 + $0xc8] sm:$0xff]
      %v225 = vld [vmem:[%s185 + $0xd0] sm:$0xff]
      %v226 = vld [vmem:[%s185 + $0xd8] sm:$0xff]
      %v227 = vld [vmem:[%s185 + $0xe0] sm:$0xff]
      %v228 = vld [vmem:[%s185 + $0xe8] sm:$0xff]
      %v229 = vld [vmem:[%s185 + $0xf0] sm:$0xff]
      %v230 = vld [vmem:[%s185 + $0xf8] sm:$0xff]
      %v231 = vld [vmem:[%s185 + $0x100] sm:$0xff]
      %v232 = vld [vmem:[%s185 + $0x108] sm:$0xff]
      %v233 = vld [vmem:[%s185 + $0x110] sm:$0xff]
      %v234 = vld [vmem:[%s185 + $0x118] sm:$0xff]
      %v235 = vld [vmem:[%s185 + $0x120] sm:$0xff]
      %v236 = vld [vmem:[%s185 + $0x128] sm:$0xff]
      %v237 = vld [vmem:[%s185 + $0x130] sm:$0xff]
      %v238 = vld [vmem:[%s185 + $0x138] sm:$0xff]
      %v239 = vld [vmem:[%s185 + $0x140] sm:$0xff]
      %v240 = vld [vmem:[%s185 + $0x148] sm:$0xff]
      %v241 = vld [vmem:[%s185 + $0x150] sm:$0xff]
      %v242 = vld [vmem:[%s185 + $0x158] sm:$0xff]
      %v243 = vld [vmem:[%s185 + $0x160] sm:$0xff]
      %v244 = vld [vmem:[%s185 + $0x168] sm:$0xff]
      %v245 = vld [vmem:[%s185 + $0x170] sm:$0xff]
      %v246 = vld [vmem:[%s185 + $0x178] sm:$0xff]
      %v247 = vld [vmem:[%s185 + $0x180] sm:$0xff]
      %v248 = vld [vmem:[%s185 + $0x188] sm:$0xff]
      %v249 = vld [vmem:[%s185 + $0x190] sm:$0xff]
      %v250 = vld [vmem:[%s185 + $0x198] sm:$0xff]
      %v251 = vld [vmem:[%s185 + $0x1a0] sm:$0xff]
      %v252 = vld [vmem:[%s185 + $0x1a8] sm:$0xff]
      %v253 = vld [vmem:[%s185 + $0x1b0] sm:$0xff]
      %v254 = vld [vmem:[%s185 + $0x1b8] sm:$0xff]
      %v255 = vld [vmem:[%s185 + $0x1c0] sm:$0xff]
      %v256 = vld [vmem:[%s185 + $0x1c8] sm:$0xff]
      %v257 = vld [vmem:[%s185 + $0x1d0] sm:$0xff]
      %v258 = vld [vmem:[%s185 + $0x1d8] sm:$0xff]
      %v259 = vld [vmem:[%s185 + $0x1e0] sm:$0xff]
      %v260 = vld [vmem:[%s185 + $0x1e8] sm:$0xff]
      %v261 = vld [vmem:[%s185 + $0x1f0] sm:$0xff]
      %v262 = vld [vmem:[%s185 + $0x1f8] sm:$0xff]
      %v263 = vld [vmem:[%s1] sm:$0xf]
      %v264 = vld [vmem:[%s1 + $0x4] sm:$0xf]
      %v265 = vld [vmem:[%s1 + $0x8] sm:$0xf]
      %v266 = vld [vmem:[%s1 + $0xc] sm:$0xf]
      %v267 = vld [vmem:[%s1 + $0x10] sm:$0xf]
      %v268 = vld [vmem:[%s1 + $0x14] sm:$0xf]
      %v269 = vld [vmem:[%s1 + $0x18] sm:$0xf]
      %v270 = vld [vmem:[%s1 + $0x1c] sm:$0xf]
      %v271 = vld [vmem:[%s1 + $0x20] sm:$0xf]
      %v272 = vld [vmem:[%s1 + $0x24] sm:$0xf]
      %v273 = vld [vmem:[%s1 + $0x28] sm:$0xf]
      %v274 = vld [vmem:[%s1 + $0x2c] sm:$0xf]
      %v275 = vld [vmem:[%s1 + $0x30] sm:$0xf]
      %v276 = vld [vmem:[%s1 + $0x34] sm:$0xf]
      %v277 = vld [vmem:[%s1 + $0x38] sm:$0xf]
      %v278 = vld [vmem:[%s1 + $0x3c] sm:$0xf]
      %v279 = vld [vmem:[%s1 + $0x40] sm:$0xf]
      %v280 = vld [vmem:[%s1 + $0x44] sm:$0xf]
      %v281 = vld [vmem:[%s1 + $0x48] sm:$0xf]
      %v282 = vld [vmem:[%s1 + $0x4c] sm:$0xf]
      %v283 = vld [vmem:[%s1 + $0x50] sm:$0xf]
      %v284 = vld [vmem:[%s1 + $0x54] sm:$0xf]
      %v285 = vld [vmem:[%s1 + $0x58] sm:$0xf]
      %v286 = vld [vmem:[%s1 + $0x5c] sm:$0xf]
      %v287 = vld [vmem:[%s1 + $0x60] sm:$0xf]
      %v288 = vld [vmem:[%s1 + $0x64] sm:$0xf]
      %v289 = vld [vmem:[%s1 + $0x68] sm:$0xf]
      %v290 = vld [vmem:[%s1 + $0x6c] sm:$0xf]
      %v291 = vld [vmem:[%s1 + $0x70] sm:$0xf]
      %v292 = vld [vmem:[%s1 + $0x74] sm:$0xf]
      %v293 = vld [vmem:[%s1 + $0x78] sm:$0xf]
      %v294 = vld [vmem:[%s1 + $0x7c] sm:$0xf]
      %v295 = vld [vmem:[%s1 + $0x80] sm:$0xf]
      %v296 = vld [vmem:[%s1 + $0x84] sm:$0xf]
      %v297 = vld [vmem:[%s1 + $0x88] sm:$0xf]
      %v298 = vld [vmem:[%s1 + $0x8c] sm:$0xf]
      %v299 = vld [vmem:[%s1 + $0x90] sm:$0xf]
      %v300 = vld [vmem:[%s1 + $0x94] sm:$0xf]
      %v301 = vld [vmem:[%s1 + $0x98] sm:$0xf]
      %v302 = vld [vmem:[%s1 + $0x9c] sm:$0xf]
      %v303 = vld [vmem:[%s1 + $0xa0] sm:$0xf]
      %v304 = vld [vmem:[%s1 + $0xa4] sm:$0xf]
      %v305 = vld [vmem:[%s1 + $0xa8] sm:$0xf]
      %v306 = vld [vmem:[%s1 + $0xac] sm:$0xf]
      %v307 = vld [vmem:[%s1 + $0xb0] sm:$0xf]
      %v308 = vld [vmem:[%s1 + $0xb4] sm:$0xf]
      %v309 = vld [vmem:[%s1 + $0xb8] sm:$0xf]
      %v310 = vld [vmem:[%s1 + $0xbc] sm:$0xf]
      %v311 = vld [vmem:[%s1 + $0xc0] sm:$0xf]
      %v312 = vld [vmem:[%s1 + $0xc4] sm:$0xf]
      %v313 = vld [vmem:[%s1 + $0xc8] sm:$0xf]
      %v314 = vld [vmem:[%s1 + $0xcc] sm:$0xf]
      %v315 = vld [vmem:[%s1 + $0xd0] sm:$0xf]
      %v316 = vld [vmem:[%s1 + $0xd4] sm:$0xf]
      %v317 = vld [vmem:[%s1 + $0xd8] sm:$0xf]
      %v318 = vld [vmem:[%s1 + $0xdc] sm:$0xf]
      %v319 = vld [vmem:[%s1 + $0xe0] sm:$0xf]
      %v320 = vld [vmem:[%s1 + $0xe4] sm:$0xf]
      %v321 = vld [vmem:[%s1 + $0xe8] sm:$0xf]
      %v322 = vld [vmem:[%s1 + $0xec] sm:$0xf]
      %v323 = vld [vmem:[%s1 + $0xf0] sm:$0xf]
      %v324 = vld [vmem:[%s1 + $0xf4] sm:$0xf]
      %v325 = vld [vmem:[%s1 + $0xf8] sm:$0xf]
      %v326 = vld [vmem:[%s1 + $0xfc] sm:$0xf]
      %v327 = vld [vmem:[%s1 + $0x100] sm:$0xf]
      %v328 = vld [vmem:[%s1 + $0x104] sm:$0xf]
      %v329 = vld [vmem:[%s1 + $0x108] sm:$0xf]
      %v330 = vld [vmem:[%s1 + $0x10c] sm:$0xf]
      %v331 = vld [vmem:[%s1 + $0x110] sm:$0xf]
      %v332 = vld [vmem:[%s1 + $0x114] sm:$0xf]
      %v333 = vld [vmem:[%s1 + $0x118] sm:$0xf]
      %v334 = vld [vmem:[%s1 + $0x11c] sm:$0xf]
      %v335 = vld [vmem:[%s1 + $0x120] sm:$0xf]
      %v336 = vld [vmem:[%s1 + $0x124] sm:$0xf]
      %v337 = vld [vmem:[%s1 + $0x128] sm:$0xf]
      %v338 = vld [vmem:[%s1 + $0x12c] sm:$0xf]
      %v339 = vld [vmem:[%s1 + $0x130] sm:$0xf]
      %v340 = vld [vmem:[%s1 + $0x134] sm:$0xf]
      %v341 = vld [vmem:[%s1 + $0x138] sm:$0xf]
      %v342 = vld [vmem:[%s1 + $0x13c] sm:$0xf]
      %v343 = vld [vmem:[%s1 + $0x140] sm:$0xf]
      %v344 = vld [vmem:[%s1 + $0x144] sm:$0xf]
      %v345 = vld [vmem:[%s1 + $0x148] sm:$0xf]
      %v346 = vld [vmem:[%s1 + $0x14c] sm:$0xf]
      %v347 = vld [vmem:[%s1 + $0x150] sm:$0xf]
      %v348 = vld [vmem:[%s1 + $0x154] sm:$0xf]
      %v349 = vld [vmem:[%s1 + $0x158] sm:$0xf]
      %v350 = vld [vmem:[%s1 + $0x15c] sm:$0xf]
      %v351 = vld [vmem:[%s1 + $0x160] sm:$0xf]
      %v352 = vld [vmem:[%s1 + $0x164] sm:$0xf]
      %v353 = vld [vmem:[%s1 + $0x168] sm:$0xf]
      %v354 = vld [vmem:[%s1 + $0x16c] sm:$0xf]
      %v355 = vld [vmem:[%s1 + $0x170] sm:$0xf]
      %v356 = vld [vmem:[%s1 + $0x174] sm:$0xf]
      %v357 = vld [vmem:[%s1 + $0x178] sm:$0xf]
      %v358 = vld [vmem:[%s1 + $0x17c] sm:$0xf]
      %v359 = vld [vmem:[%s1 + $0x180] sm:$0xf]
      %v360 = vld [vmem:[%s1 + $0x184] sm:$0xf]
      %v361 = vld [vmem:[%s1 + $0x188] sm:$0xf]
      %v362 = vld [vmem:[%s1 + $0x18c] sm:$0xf]
      %v363 = vld [vmem:[%s1 + $0x190] sm:$0xf]
      %v364 = vld [vmem:[%s1 + $0x194] sm:$0xf]
      %v365 = vld [vmem:[%s1 + $0x198] sm:$0xf]
      %v366 = vld [vmem:[%s1 + $0x19c] sm:$0xf]
      %v367 = vld [vmem:[%s1 + $0x1a0] sm:$0xf]
      %v368 = vld [vmem:[%s1 + $0x1a4] sm:$0xf]
      %v369 = vld [vmem:[%s1 + $0x1a8] sm:$0xf]
      %v370 = vld [vmem:[%s1 + $0x1ac] sm:$0xf]
      %v371 = vld [vmem:[%s1 + $0x1b0] sm:$0xf]
      %v372 = vld [vmem:[%s1 + $0x1b4] sm:$0xf]
      %v373 = vld [vmem:[%s1 + $0x1b8] sm:$0xf]
      %v374 = vld [vmem:[%s1 + $0x1bc] sm:$0xf]
      %v375 = vld [vmem:[%s1 + $0x1c0] sm:$0xf]
      %v376 = vld [vmem:[%s1 + $0x1c4] sm:$0xf]
      %v377 = vld [vmem:[%s1 + $0x1c8] sm:$0xf]
      %v378 = vld [vmem:[%s1 + $0x1cc] sm:$0xf]
      %v379 = vld [vmem:[%s1 + $0x1d0] sm:$0xf]
      %v380 = vld [vmem:[%s1 + $0x1d4] sm:$0xf]
      %v381 = vld [vmem:[%s1 + $0x1d8] sm:$0xf]
      %v382 = vld [vmem:[%s1 + $0x1dc] sm:$0xf]
      %v383 = vld [vmem:[%s1 + $0x1e0] sm:$0xf]
      %v384 = vld [vmem:[%s1 + $0x1e4] sm:$0xf]
      %v385 = vld [vmem:[%s1 + $0x1e8] sm:$0xf]
      %v386 = vld [vmem:[%s1 + $0x1ec] sm:$0xf]
      %v387 = vld [vmem:[%s1 + $0x1f0] sm:$0xf]
      %v388 = vld [vmem:[%s1 + $0x1f4] sm:$0xf]
      %v389 = vld [vmem:[%s1 + $0x1f8] sm:$0xf]
      %v390 = vld [vmem:[%s1 + $0x1fc] sm:$0xf]
      %v391 = vld [vmem:[%s191] sm:$0xff]
      %v392 = vld [vmem:[%s191 + $0x8] sm:$0xff]
      %v393 = vld [vmem:[%s191 + $0x10] sm:$0xff]
      %v394 = vld [vmem:[%s191 + $0x18] sm:$0xff]
      %v395 = vld [vmem:[%s191 + $0x20] sm:$0xff]
      %v396 = vld [vmem:[%s191 + $0x28] sm:$0xff]
      %v397 = vld [vmem:[%s191 + $0x30] sm:$0xff]
      %v398 = vld [vmem:[%s191 + $0x38] sm:$0xff]
      %v399 = vld [vmem:[%s191 + $0x40] sm:$0xff]
      %v400 = vld [vmem:[%s191 + $0x48] sm:$0xff]
      %v401 = vld [vmem:[%s191 + $0x50] sm:$0xff]
      %v402 = vld [vmem:[%s191 + $0x58] sm:$0xff]
      %v403 = vld [vmem:[%s191 + $0x60] sm:$0xff]
      %v404 = vld [vmem:[%s191 + $0x68] sm:$0xff]
      %v405 = vld [vmem:[%s191 + $0x70] sm:$0xff]
      %v406 = vld [vmem:[%s191 + $0x78] sm:$0xff]
      %v471 = vunpack.c.l.b16 %v199
      %v472 = vunpack.c.h.b16 %v199
      %v473 = vunpack.c.l.b16 %v200
      %v474 = vunpack.c.h.b16 %v200
      %v475 = vunpack.c.l.b16 %v201
      %v476 = vunpack.c.h.b16 %v201
      %v477 = vunpack.c.l.b16 %v202
      %v478 = vunpack.c.h.b16 %v202
      %v479 = vunpack.c.l.b16 %v203
      %v480 = vunpack.c.h.b16 %v203
      %v481 = vunpack.c.l.b16 %v204
      %v482 = vunpack.c.h.b16 %v204
      %v483 = vunpack.c.l.b16 %v205
      %v484 = vunpack.c.h.b16 %v205
      %v485 = vunpack.c.l.b16 %v206
      %v486 = vunpack.c.h.b16 %v206
      %v487 = vunpack.c.l.b16 %v207
      %v488 = vunpack.c.h.b16 %v207
      %v489 = vunpack.c.l.b16 %v208
      %v490 = vunpack.c.h.b16 %v208
      %v491 = vunpack.c.l.b16 %v209
      %v492 = vunpack.c.h.b16 %v209
      %v493 = vunpack.c.l.b16 %v210
      %v494 = vunpack.c.h.b16 %v210
      %v495 = vunpack.c.l.b16 %v211
      %v496 = vunpack.c.h.b16 %v211
      %v497 = vunpack.c.l.b16 %v212
      %v498 = vunpack.c.h.b16 %v212
      %v499 = vunpack.c.l.b16 %v213
      %v500 = vunpack.c.h.b16 %v213
      %v501 = vunpack.c.l.b16 %v214
      %v502 = vunpack.c.h.b16 %v214
      %v503 = vunpack.c.l.b16 %v215
      %v504 = vunpack.c.h.b16 %v215
      %v505 = vunpack.c.l.b16 %v216
      %v506 = vunpack.c.h.b16 %v216
      %v507 = vunpack.c.l.b16 %v217
      %v508 = vunpack.c.h.b16 %v217
      %v509 = vunpack.c.l.b16 %v218
      %v510 = vunpack.c.h.b16 %v218
      %v511 = vunpack.c.l.b16 %v219
      %v512 = vunpack.c.h.b16 %v219
      %v513 = vunpack.c.l.b16 %v220
      %v514 = vunpack.c.h.b16 %v220
      %v515 = vunpack.c.l.b16 %v221
      %v516 = vunpack.c.h.b16 %v221
      %v517 = vunpack.c.l.b16 %v222
      %v518 = vunpack.c.h.b16 %v222
      %v519 = vunpack.c.l.b16 %v223
      %v520 = vunpack.c.h.b16 %v223
      %v521 = vunpack.c.l.b16 %v224
      %v522 = vunpack.c.h.b16 %v224
      %v523 = vunpack.c.l.b16 %v225
      %v524 = vunpack.c.h.b16 %v225
      %v525 = vunpack.c.l.b16 %v226
      %v526 = vunpack.c.h.b16 %v226
      %v527 = vunpack.c.l.b16 %v227
      %v528 = vunpack.c.h.b16 %v227
      %v529 = vunpack.c.l.b16 %v228
      %v530 = vunpack.c.h.b16 %v228
      %v531 = vunpack.c.l.b16 %v229
      %v532 = vunpack.c.h.b16 %v229
      %v533 = vunpack.c.l.b16 %v230
      %v534 = vunpack.c.h.b16 %v230
      %v535 = vunpack.c.l.b16 %v231
      %v536 = vunpack.c.h.b16 %v231
      %v537 = vunpack.c.l.b16 %v232
      %v538 = vunpack.c.h.b16 %v232
      %v539 = vunpack.c.l.b16 %v233
      %v540 = vunpack.c.h.b16 %v233
      %v541 = vunpack.c.l.b16 %v234
      %v542 = vunpack.c.h.b16 %v234
      %v543 = vunpack.c.l.b16 %v235
      %v544 = vunpack.c.h.b16 %v235
      %v545 = vunpack.c.l.b16 %v236
      %v546 = vunpack.c.h.b16 %v236
      %v547 = vunpack.c.l.b16 %v237
      %v548 = vunpack.c.h.b16 %v237
      %v549 = vunpack.c.l.b16 %v238
      %v550 = vunpack.c.h.b16 %v238
      %v551 = vunpack.c.l.b16 %v239
      %v552 = vunpack.c.h.b16 %v239
      %v553 = vunpack.c.l.b16 %v240
      %v554 = vunpack.c.h.b16 %v240
      %v555 = vunpack.c.l.b16 %v241
      %v556 = vunpack.c.h.b16 %v241
      %v557 = vunpack.c.l.b16 %v242
      %v558 = vunpack.c.h.b16 %v242
      %v559 = vunpack.c.l.b16 %v243
      %v560 = vunpack.c.h.b16 %v243
      %v561 = vunpack.c.l.b16 %v244
      %v562 = vunpack.c.h.b16 %v244
      %v563 = vunpack.c.l.b16 %v245
      %v564 = vunpack.c.h.b16 %v245
      %v565 = vunpack.c.l.b16 %v246
      %v566 = vunpack.c.h.b16 %v246
      %v567 = vunpack.c.l.b16 %v247
      %v568 = vunpack.c.h.b16 %v247
      %v569 = vunpack.c.l.b16 %v248
      %v570 = vunpack.c.h.b16 %v248
      %v571 = vunpack.c.l.b16 %v249
      %v572 = vunpack.c.h.b16 %v249
      %v573 = vunpack.c.l.b16 %v250
      %v574 = vunpack.c.h.b16 %v250
      %v575 = vunpack.c.l.b16 %v251
      %v576 = vunpack.c.h.b16 %v251
      %v577 = vunpack.c.l.b16 %v252
      %v578 = vunpack.c.h.b16 %v252
      %v579 = vunpack.c.l.b16 %v253
      %v580 = vunpack.c.h.b16 %v253
      %v581 = vunpack.c.l.b16 %v254
      %v582 = vunpack.c.h.b16 %v254
      %v583 = vunpack.c.l.b16 %v255
      %v584 = vunpack.c.h.b16 %v255
      %v585 = vunpack.c.l.b16 %v256
      %v586 = vunpack.c.h.b16 %v256
      %v587 = vunpack.c.l.b16 %v257
      %v588 = vunpack.c.h.b16 %v257
      %v589 = vunpack.c.l.b16 %v258
      %v590 = vunpack.c.h.b16 %v258
      %v591 = vunpack.c.l.b16 %v259
      %v592 = vunpack.c.h.b16 %v259
      %v593 = vunpack.c.l.b16 %v260
      %v594 = vunpack.c.h.b16 %v260
      %v595 = vunpack.c.l.b16 %v261
      %v596 = vunpack.c.h.b16 %v261
      %v597 = vunpack.c.l.b16 %v262
      %v598 = vunpack.c.h.b16 %v262
      %v599 = vpack.c.b16 %v479, %v471
      %v600 = vpack.c.b16 %v480, %v472
      %v601 = vpack.c.b16 %v481, %v473
      %v602 = vpack.c.b16 %v482, %v474
      %v603 = vpack.c.b16 %v483, %v475
      %v604 = vpack.c.b16 %v484, %v476
      %v605 = vpack.c.b16 %v485, %v477
      %v606 = vpack.c.b16 %v486, %v478
      %v607 = vpack.c.b16 %v495, %v487
      %v608 = vpack.c.b16 %v496, %v488
      %v609 = vpack.c.b16 %v497, %v489
      %v610 = vpack.c.b16 %v498, %v490
      %v611 = vpack.c.b16 %v499, %v491
      %v612 = vpack.c.b16 %v500, %v492
      %v613 = vpack.c.b16 %v501, %v493
      %v614 = vpack.c.b16 %v502, %v494
      %v615 = vpack.c.b16 %v511, %v503
      %v616 = vpack.c.b16 %v512, %v504
      %v617 = vpack.c.b16 %v513, %v505
      %v618 = vpack.c.b16 %v514, %v506
      %v619 = vpack.c.b16 %v515, %v507
      %v620 = vpack.c.b16 %v516, %v508
      %v621 = vpack.c.b16 %v517, %v509
      %v622 = vpack.c.b16 %v518, %v510
      %v623 = vpack.c.b16 %v527, %v519
      %v624 = vpack.c.b16 %v528, %v520
      %v625 = vpack.c.b16 %v529, %v521
      %v626 = vpack.c.b16 %v530, %v522
      %v627 = vpack.c.b16 %v531, %v523
      %v628 = vpack.c.b16 %v532, %v524
      %v629 = vpack.c.b16 %v533, %v525
      %v630 = vpack.c.b16 %v534, %v526
      %v631 = vpack.c.b16 %v543, %v535
      %v632 = vpack.c.b16 %v544, %v536
      %v633 = vpack.c.b16 %v545, %v537
      %v634 = vpack.c.b16 %v546, %v538
      %v635 = vpack.c.b16 %v547, %v539
      %v636 = vpack.c.b16 %v548, %v540
      %v637 = vpack.c.b16 %v549, %v541
      %v638 = vpack.c.b16 %v550, %v542
      %v639 = vpack.c.b16 %v559, %v551
      %v640 = vpack.c.b16 %v560, %v552
      %v641 = vpack.c.b16 %v561, %v553
      %v642 = vpack.c.b16 %v562, %v554
      %v643 = vpack.c.b16 %v563, %v555
      %v644 = vpack.c.b16 %v564, %v556
      %v645 = vpack.c.b16 %v565, %v557
      %v646 = vpack.c.b16 %v566, %v558
      %v647 = vpack.c.b16 %v575, %v567
      %v648 = vpack.c.b16 %v576, %v568
      %v649 = vpack.c.b16 %v577, %v569
      %v650 = vpack.c.b16 %v578, %v570
      %v651 = vpack.c.b16 %v579, %v571
      %v652 = vpack.c.b16 %v580, %v572
      %v653 = vpack.c.b16 %v581, %v573
      %v654 = vpack.c.b16 %v582, %v574
      %v655 = vpack.c.b16 %v591, %v583
      %v656 = vpack.c.b16 %v592, %v584
      %v657 = vpack.c.b16 %v593, %v585
      %v658 = vpack.c.b16 %v594, %v586
      %v659 = vpack.c.b16 %v595, %v587
      %v660 = vpack.c.b16 %v596, %v588
      %v661 = vpack.c.b16 %v597, %v589
      %v662 = vpack.c.b16 %v598, %v590
      %v855 = vunpack.c.l.b16 %v263
      %v856 = vunpack.c.l.b16 %v264
      %v857 = vunpack.c.l.b16 %v265
      %v858 = vunpack.c.l.b16 %v266
      %v859 = vunpack.c.l.b16 %v267
      %v860 = vunpack.c.l.b16 %v268
      %v861 = vunpack.c.l.b16 %v269
      %v862 = vunpack.c.l.b16 %v270
      %v863 = vunpack.c.l.b16 %v271
      %v864 = vunpack.c.l.b16 %v272
      %v865 = vunpack.c.l.b16 %v273
      %v866 = vunpack.c.l.b16 %v274
      %v867 = vunpack.c.l.b16 %v275
      %v868 = vunpack.c.l.b16 %v276
      %v869 = vunpack.c.l.b16 %v277
      %v870 = vunpack.c.l.b16 %v278
      %v871 = vunpack.c.l.b16 %v279
      %v872 = vunpack.c.l.b16 %v280
      %v873 = vunpack.c.l.b16 %v281
      %v874 = vunpack.c.l.b16 %v282
      %v875 = vunpack.c.l.b16 %v283
      %v876 = vunpack.c.l.b16 %v284
      %v877 = vunpack.c.l.b16 %v285
      %v878 = vunpack.c.l.b16 %v286
      %v879 = vunpack.c.l.b16 %v287
      %v880 = vunpack.c.l.b16 %v288
      %v881 = vunpack.c.l.b16 %v289
      %v882 = vunpack.c.l.b16 %v290
      %v883 = vunpack.c.l.b16 %v291
      %v884 = vunpack.c.l.b16 %v292
      %v885 = vunpack.c.l.b16 %v293
      %v886 = vunpack.c.l.b16 %v294
      %v887 = vunpack.c.l.b16 %v295
      %v888 = vunpack.c.l.b16 %v296
      %v889 = vunpack.c.l.b16 %v297
      %v890 = vunpack.c.l.b16 %v298
      %v891 = vunpack.c.l.b16 %v299
      %v892 = vunpack.c.l.b16 %v300
      %v893 = vunpack.c.l.b16 %v301
      %v894 = vunpack.c.l.b16 %v302
      %v895 = vunpack.c.l.b16 %v303
      %v896 = vunpack.c.l.b16 %v304
      %v897 = vunpack.c.l.b16 %v305
      %v898 = vunpack.c.l.b16 %v306
      %v899 = vunpack.c.l.b16 %v307
      %v900 = vunpack.c.l.b16 %v308
      %v901 = vunpack.c.l.b16 %v309
      %v902 = vunpack.c.l.b16 %v310
      %v903 = vunpack.c.l.b16 %v311
      %v904 = vunpack.c.l.b16 %v312
      %v905 = vunpack.c.l.b16 %v313
      %v906 = vunpack.c.l.b16 %v314
      %v907 = vunpack.c.l.b16 %v315
      %v908 = vunpack.c.l.b16 %v316
      %v909 = vunpack.c.l.b16 %v317
      %v910 = vunpack.c.l.b16 %v318
      %v911 = vunpack.c.l.b16 %v319
      %v912 = vunpack.c.l.b16 %v320
      %v913 = vunpack.c.l.b16 %v321
      %v914 = vunpack.c.l.b16 %v322
      %v915 = vunpack.c.l.b16 %v323
      %v916 = vunpack.c.l.b16 %v324
      %v917 = vunpack.c.l.b16 %v325
      %v918 = vunpack.c.l.b16 %v326
      %v919 = vunpack.c.l.b16 %v327
      %v920 = vunpack.c.l.b16 %v328
      %v921 = vunpack.c.l.b16 %v329
      %v922 = vunpack.c.l.b16 %v330
      %v923 = vunpack.c.l.b16 %v331
      %v924 = vunpack.c.l.b16 %v332
      %v925 = vunpack.c.l.b16 %v333
      %v926 = vunpack.c.l.b16 %v334
      %v927 = vunpack.c.l.b16 %v335
      %v928 = vunpack.c.l.b16 %v336
      %v929 = vunpack.c.l.b16 %v337
      %v930 = vunpack.c.l.b16 %v338
      %v931 = vunpack.c.l.b16 %v339
      %v932 = vunpack.c.l.b16 %v340
      %v933 = vunpack.c.l.b16 %v341
      %v934 = vunpack.c.l.b16 %v342
      %v935 = vunpack.c.l.b16 %v343
      %v936 = vunpack.c.l.b16 %v344
      %v937 = vunpack.c.l.b16 %v345
      %v938 = vunpack.c.l.b16 %v346
      %v939 = vunpack.c.l.b16 %v347
      %v940 = vunpack.c.l.b16 %v348
      %v941 = vunpack.c.l.b16 %v349
      %v942 = vunpack.c.l.b16 %v350
      %v943 = vunpack.c.l.b16 %v351
      %v944 = vunpack.c.l.b16 %v352
      %v945 = vunpack.c.l.b16 %v353
      %v946 = vunpack.c.l.b16 %v354
      %v947 = vunpack.c.l.b16 %v355
      %v948 = vunpack.c.l.b16 %v356
      %v949 = vunpack.c.l.b16 %v357
      %v950 = vunpack.c.l.b16 %v358
      %v951 = vunpack.c.l.b16 %v359
      %v952 = vunpack.c.l.b16 %v360
      %v953 = vunpack.c.l.b16 %v361
      %v954 = vunpack.c.l.b16 %v362
      %v955 = vunpack.c.l.b16 %v363
      %v956 = vunpack.c.l.b16 %v364
      %v957 = vunpack.c.l.b16 %v365
      %v958 = vunpack.c.l.b16 %v366
      %v959 = vunpack.c.l.b16 %v367
      %v960 = vunpack.c.l.b16 %v368
      %v961 = vunpack.c.l.b16 %v369
      %v962 = vunpack.c.l.b16 %v370
      %v963 = vunpack.c.l.b16 %v371
      %v964 = vunpack.c.l.b16 %v372
      %v965 = vunpack.c.l.b16 %v373
      %v966 = vunpack.c.l.b16 %v374
      %v967 = vunpack.c.l.b16 %v375
      %v968 = vunpack.c.l.b16 %v376
      %v969 = vunpack.c.l.b16 %v377
      %v970 = vunpack.c.l.b16 %v378
      %v971 = vunpack.c.l.b16 %v379
      %v972 = vunpack.c.l.b16 %v380
      %v973 = vunpack.c.l.b16 %v381
      %v974 = vunpack.c.l.b16 %v382
      %v975 = vunpack.c.l.b16 %v383
      %v976 = vunpack.c.l.b16 %v384
      %v977 = vunpack.c.l.b16 %v385
      %v978 = vunpack.c.l.b16 %v386
      %v979 = vunpack.c.l.b16 %v387
      %v980 = vunpack.c.l.b16 %v388
      %v981 = vunpack.c.l.b16 %v389
      %v982 = vunpack.c.l.b16 %v390
      %v983 = vpack.c.b16 %v856, %v855
      %v984 = vpack.c.b16 %v858, %v857
      %v985 = vpack.c.b16 %v860, %v859
      %v986 = vpack.c.b16 %v862, %v861
      %v987 = vpack.c.b16 %v864, %v863
      %v988 = vpack.c.b16 %v866, %v865
      %v989 = vpack.c.b16 %v868, %v867
      %v990 = vpack.c.b16 %v870, %v869
      %v991 = vpack.c.b16 %v872, %v871
      %v992 = vpack.c.b16 %v874, %v873
      %v993 = vpack.c.b16 %v876, %v875
      %v994 = vpack.c.b16 %v878, %v877
      %v995 = vpack.c.b16 %v880, %v879
      %v996 = vpack.c.b16 %v882, %v881
      %v997 = vpack.c.b16 %v884, %v883
      %v998 = vpack.c.b16 %v886, %v885
      %v999 = vpack.c.b16 %v888, %v887
      %v1000 = vpack.c.b16 %v890, %v889
      %v1001 = vpack.c.b16 %v892, %v891
      %v1002 = vpack.c.b16 %v894, %v893
      %v1003 = vpack.c.b16 %v896, %v895
      %v1004 = vpack.c.b16 %v898, %v897
      %v1005 = vpack.c.b16 %v900, %v899
      %v1006 = vpack.c.b16 %v902, %v901
      %v1007 = vpack.c.b16 %v904, %v903
      %v1008 = vpack.c.b16 %v906, %v905
      %v1009 = vpack.c.b16 %v908, %v907
      %v1010 = vpack.c.b16 %v910, %v909
      %v1011 = vpack.c.b16 %v912, %v911
      %v1012 = vpack.c.b16 %v914, %v913
      %v1013 = vpack.c.b16 %v916, %v915
      %v1014 = vpack.c.b16 %v918, %v917
      %v1015 = vpack.c.b16 %v920, %v919
      %v1016 = vpack.c.b16 %v922, %v921
      %v1017 = vpack.c.b16 %v924, %v923
      %v1018 = vpack.c.b16 %v926, %v925
      %v1019 = vpack.c.b16 %v928, %v927
      %v1020 = vpack.c.b16 %v930, %v929
      %v1021 = vpack.c.b16 %v932, %v931
      %v1022 = vpack.c.b16 %v934, %v933
      %v1023 = vpack.c.b16 %v936, %v935
      %v1024 = vpack.c.b16 %v938, %v937
      %v1025 = vpack.c.b16 %v940, %v939
      %v1026 = vpack.c.b16 %v942, %v941
      %v1027 = vpack.c.b16 %v944, %v943
      %v1028 = vpack.c.b16 %v946, %v945
      %v1029 = vpack.c.b16 %v948, %v947
      %v1030 = vpack.c.b16 %v950, %v949
      %v1031 = vpack.c.b16 %v952, %v951
      %v1032 = vpack.c.b16 %v954, %v953
      %v1033 = vpack.c.b16 %v956, %v955
      %v1034 = vpack.c.b16 %v958, %v957
      %v1035 = vpack.c.b16 %v960, %v959
      %v1036 = vpack.c.b16 %v962, %v961
      %v1037 = vpack.c.b16 %v964, %v963
      %v1038 = vpack.c.b16 %v966, %v965
      %v1039 = vpack.c.b16 %v968, %v967
      %v1040 = vpack.c.b16 %v970, %v969
      %v1041 = vpack.c.b16 %v972, %v971
      %v1042 = vpack.c.b16 %v974, %v973
      %v1043 = vpack.c.b16 %v976, %v975
      %v1044 = vpack.c.b16 %v978, %v977
      %v1045 = vpack.c.b16 %v980, %v979
      %v1046 = vpack.c.b16 %v982, %v981
      %1111 = vmatpush.bf16.msra.mxu0 %v990
      %1112 = vmatpush.bf16.msra.mxu0 %v989
      %1113 = vmatpush.bf16.msra.mxu0 %v988
      %1114 = vmatpush.bf16.msra.mxu0 %v987
      %1115 = vmatpush.bf16.msra.mxu0 %v986
      %1116 = vmatpush.bf16.msra.mxu0 %v985
      %1117 = vmatpush.bf16.msra.mxu0 %v984
      %1118 = vmatpush.bf16.msra.mxu0 %v983
      %1119 = vmatmul.bf16.gmra.mxu0 %v599
      %v1120 = vpop.f32.mrf.mxu0
      %v1121 = vadd.f32 %v391, %v1120
      %v1122 = vpop.f32.mrf.mxu0
      %v1123 = vadd.f32 %v392, %v1122
      %1124 = vmatmul.bf16.gmra.mxu0 %v607
      %v1125 = vpop.f32.mrf.mxu0
      %v1126 = vadd.f32 %v393, %v1125
      %v1127 = vpop.f32.mrf.mxu0
      %v1128 = vadd.f32 %v394, %v1127
      %1129 = vmatmul.bf16.gmra.mxu0 %v615
      %v1130 = vpop.f32.mrf.mxu0
      %v1131 = vadd.f32 %v395, %v1130
      %v1132 = vpop.f32.mrf.mxu0
      %v1133 = vadd.f32 %v396, %v1132
      %1134 = vmatmul.bf16.gmra.mxu0 %v623
      %v1135 = vpop.f32.mrf.mxu0
      %v1136 = vadd.f32 %v397, %v1135
      %v1137 = vpop.f32.mrf.mxu0
      %v1138 = vadd.f32 %v398, %v1137
      %1139 = vmatmul.bf16.gmra.mxu0 %v631
      %v1140 = vpop.f32.mrf.mxu0
      %v1141 = vadd.f32 %v399, %v1140
      %v1142 = vpop.f32.mrf.mxu0
      %v1143 = vadd.f32 %v400, %v1142
      %1144 = vmatmul.bf16.gmra.mxu0 %v639
      %v1145 = vpop.f32.mrf.mxu0
      %v1146 = vadd.f32 %v401, %v1145
      %v1147 = vpop.f32.mrf.mxu0
      %v1148 = vadd.f32 %v402, %v1147
      %1149 = vmatmul.bf16.gmra.mxu0 %v647
      %v1150 = vpop.f32.mrf.mxu0
      %v1151 = vadd.f32 %v403, %v1150
      %v1152 = vpop.f32.mrf.mxu0
      %v1153 = vadd.f32 %v404, %v1152
      %1154 = vmatmul.bf16.gmra.mxu0 %v655
      %v1155 = vpop.f32.mrf.mxu0
      %v1156 = vadd.f32 %v405, %v1155
      %v1157 = vpop.f32.mrf.mxu0
      %v1158 = vadd.f32 %v406, %v1157
      %1159 = vdwg.mxu0
      %1160 = vmatpush.bf16.msra.mxu0 %v998
      %1161 = vmatpush.bf16.msra.mxu0 %v997
      %1162 = vmatpush.bf16.msra.mxu0 %v996
      %1163 = vmatpush.bf16.msra.mxu0 %v995
      %1164 = vmatpush.bf16.msra.mxu0 %v994
      %1165 = vmatpush.bf16.msra.mxu0 %v993
      %1166 = vmatpush.bf16.msra.mxu0 %v992
      %1167 = vmatpush.bf16.msra.mxu0 %v991
      %1168 = vmatmul.bf16.gmra.mxu0 %v600
      %v1169 = vpop.f32.mrf.mxu0
      %v1170 = vadd.f32 %v1121, %v1169
      %v1171 = vpop.f32.mrf.mxu0
      %v1172 = vadd.f32 %v1123, %v1171
      %1173 = vmatmul.bf16.gmra.mxu0 %v608
      %v1174 = vpop.f32.mrf.mxu0
      %v1175 = vadd.f32 %v1126, %v1174
      %v1176 = vpop.f32.mrf.mxu0
      %v1177 = vadd.f32 %v1128, %v1176
      %1178 = vmatmul.bf16.gmra.mxu0 %v616
      %v1179 = vpop.f32.mrf.mxu0
      %v1180 = vadd.f32 %v1131, %v1179
      %v1181 = vpop.f32.mrf.mxu0
      %v1182 = vadd.f32 %v1133, %v1181
      %1183 = vmatmul.bf16.gmra.mxu0 %v624
      %v1184 = vpop.f32.mrf.mxu0
      %v1185 = vadd.f32 %v1136, %v1184
      %v1186 = vpop.f32.mrf.mxu0
      %v1187 = vadd.f32 %v1138, %v1186
      %1188 = vmatmul.bf16.gmra.mxu0 %v632
      %v1189 = vpop.f32.mrf.mxu0
      %v1190 = vadd.f32 %v1141, %v1189
      %v1191 = vpop.f32.mrf.mxu0
      %v1192 = vadd.f32 %v1143, %v1191
      %1193 = vmatmul.bf16.gmra.mxu0 %v640
      %v1194 = vpop.f32.mrf.mxu0
      %v1195 = vadd.f32 %v1146, %v1194
      %v1196 = vpop.f32.mrf.mxu0
      %v1197 = vadd.f32 %v1148, %v1196
      %1198 = vmatmul.bf16.gmra.mxu0 %v648
      %v1199 = vpop.f32.mrf.mxu0
      %v1200 = vadd.f32 %v1151, %v1199
      %v1201 = vpop.f32.mrf.mxu0
      %v1202 = vadd.f32 %v1153, %v1201
      %1203 = vmatmul.bf16.gmra.mxu0 %v656
      %v1204 = vpop.f32.mrf.mxu0
      %v1205 = vadd.f32 %v1156, %v1204
      %v1206 = vpop.f32.mrf.mxu0
      %v1207 = vadd.f32 %v1158, %v1206
      %1208 = vdwg.mxu0
      %1209 = vmatpush.bf16.msra.mxu0 %v1006
      %1210 = vmatpush.bf16.msra.mxu0 %v1005
      %1211 = vmatpush.bf16.msra.mxu0 %v1004
      %1212 = vmatpush.bf16.msra.mxu0 %v1003
      %1213 = vmatpush.bf16.msra.mxu0 %v1002
      %1214 = vmatpush.bf16.msra.mxu0 %v1001
      %1215 = vmatpush.bf16.msra.mxu0 %v1000
      %1216 = vmatpush.bf16.msra.mxu0 %v999
      %1217 = vmatmul.bf16.gmra.mxu0 %v601
      %v1218 = vpop.f32.mrf.mxu0
      %v1219 = vadd.f32 %v1170, %v1218
      %v1220 = vpop.f32.mrf.mxu0
      %v1221 = vadd.f32 %v1172, %v1220
      %1222 = vmatmul.bf16.gmra.mxu0 %v609
      %v1223 = vpop.f32.mrf.mxu0
      %v1224 = vadd.f32 %v1175, %v1223
      %v1225 = vpop.f32.mrf.mxu0
      %v1226 = vadd.f32 %v1177, %v1225
      %1227 = vmatmul.bf16.gmra.mxu0 %v617
      %v1228 = vpop.f32.mrf.mxu0
      %v1229 = vadd.f32 %v1180, %v1228
      %v1230 = vpop.f32.mrf.mxu0
      %v1231 = vadd.f32 %v1182, %v1230
      %1232 = vmatmul.bf16.gmra.mxu0 %v625
      %v1233 = vpop.f32.mrf.mxu0
      %v1234 = vadd.f32 %v1185, %v1233
      %v1235 = vpop.f32.mrf.mxu0
      %v1236 = vadd.f32 %v1187, %v1235
      %1237 = vmatmul.bf16.gmra.mxu0 %v633
      %v1238 = vpop.f32.mrf.mxu0
      %v1239 = vadd.f32 %v1190, %v1238
      %v1240 = vpop.f32.mrf.mxu0
      %v1241 = vadd.f32 %v1192, %v1240
      %1242 = vmatmul.bf16.gmra.mxu0 %v641
      %v1243 = vpop.f32.mrf.mxu0
      %v1244 = vadd.f32 %v1195, %v1243
      %v1245 = vpop.f32.mrf.mxu0
      %v1246 = vadd.f32 %v1197, %v1245
      %1247 = vmatmul.bf16.gmra.mxu0 %v649
      %v1248 = vpop.f32.mrf.mxu0
      %v1249 = vadd.f32 %v1200, %v1248
      %v1250 = vpop.f32.mrf.mxu0
      %v1251 = vadd.f32 %v1202, %v1250
      %1252 = vmatmul.bf16.gmra.mxu0 %v657
      %v1253 = vpop.f32.mrf.mxu0
      %v1254 = vadd.f32 %v1205, %v1253
      %v1255 = vpop.f32.mrf.mxu0
      %v1256 = vadd.f32 %v1207, %v1255
      %1257 = vdwg.mxu0
      %1258 = vmatpush.bf16.msra.mxu0 %v1014
      %1259 = vmatpush.bf16.msra.mxu0 %v1013
      %1260 = vmatpush.bf16.msra.mxu0 %v1012
      %1261 = vmatpush.bf16.msra.mxu0 %v1011
      %1262 = vmatpush.bf16.msra.mxu0 %v1010
      %1263 = vmatpush.bf16.msra.mxu0 %v1009
      %1264 = vmatpush.bf16.msra.mxu0 %v1008
      %1265 = vmatpush.bf16.msra.mxu0 %v1007
      %1266 = vmatmul.bf16.gmra.mxu0 %v602
      %v1267 = vpop.f32.mrf.mxu0
      %v1268 = vadd.f32 %v1219, %v1267
      %v1269 = vpop.f32.mrf.mxu0
      %v1270 = vadd.f32 %v1221, %v1269
      %1271 = vmatmul.bf16.gmra.mxu0 %v610
      %v1272 = vpop.f32.mrf.mxu0
      %v1273 = vadd.f32 %v1224, %v1272
      %v1274 = vpop.f32.mrf.mxu0
      %v1275 = vadd.f32 %v1226, %v1274
      %1276 = vmatmul.bf16.gmra.mxu0 %v618
      %v1277 = vpop.f32.mrf.mxu0
      %v1278 = vadd.f32 %v1229, %v1277
      %v1279 = vpop.f32.mrf.mxu0
      %v1280 = vadd.f32 %v1231, %v1279
      %1281 = vmatmul.bf16.gmra.mxu0 %v626
      %v1282 = vpop.f32.mrf.mxu0
      %v1283 = vadd.f32 %v1234, %v1282
      %v1284 = vpop.f32.mrf.mxu0
      %v1285 = vadd.f32 %v1236, %v1284
      %1286 = vmatmul.bf16.gmra.mxu0 %v634
      %v1287 = vpop.f32.mrf.mxu0
      %v1288 = vadd.f32 %v1239, %v1287
      %v1289 = vpop.f32.mrf.mxu0
      %v1290 = vadd.f32 %v1241, %v1289
      %1291 = vmatmul.bf16.gmra.mxu0 %v642
      %v1292 = vpop.f32.mrf.mxu0
      %v1293 = vadd.f32 %v1244, %v1292
      %v1294 = vpop.f32.mrf.mxu0
      %v1295 = vadd.f32 %v1246, %v1294
      %1296 = vmatmul.bf16.gmra.mxu0 %v650
      %v1297 = vpop.f32.mrf.mxu0
      %v1298 = vadd.f32 %v1249, %v1297
      %v1299 = vpop.f32.mrf.mxu0
      %v1300 = vadd.f32 %v1251, %v1299
      %1301 = vmatmul.bf16.gmra.mxu0 %v658
      %v1302 = vpop.f32.mrf.mxu0
      %v1303 = vadd.f32 %v1254, %v1302
      %v1304 = vpop.f32.mrf.mxu0
      %v1305 = vadd.f32 %v1256, %v1304
      %1306 = vdwg.mxu0
      %1307 = vmatpush.bf16.msra.mxu0 %v1022
      %1308 = vmatpush.bf16.msra.mxu0 %v1021
      %1309 = vmatpush.bf16.msra.mxu0 %v1020
      %1310 = vmatpush.bf16.msra.mxu0 %v1019
      %1311 = vmatpush.bf16.msra.mxu0 %v1018
      %1312 = vmatpush.bf16.msra.mxu0 %v1017
      %1313 = vmatpush.bf16.msra.mxu0 %v1016
      %1314 = vmatpush.bf16.msra.mxu0 %v1015
      %1315 = vmatmul.bf16.gmra.mxu0 %v603
      %v1316 = vpop.f32.mrf.mxu0
      %v1317 = vadd.f32 %v1268, %v1316
      %v1318 = vpop.f32.mrf.mxu0
      %v1319 = vadd.f32 %v1270, %v1318
      %1320 = vmatmul.bf16.gmra.mxu0 %v611
      %v1321 = vpop.f32.mrf.mxu0
      %v1322 = vadd.f32 %v1273, %v1321
      %v1323 = vpop.f32.mrf.mxu0
      %v1324 = vadd.f32 %v1275, %v1323
      %1325 = vmatmul.bf16.gmra.mxu0 %v619
      %v1326 = vpop.f32.mrf.mxu0
      %v1327 = vadd.f32 %v1278, %v1326
      %v1328 = vpop.f32.mrf.mxu0
      %v1329 = vadd.f32 %v1280, %v1328
      %1330 = vmatmul.bf16.gmra.mxu0 %v627
      %v1331 = vpop.f32.mrf.mxu0
      %v1332 = vadd.f32 %v1283, %v1331
      %v1333 = vpop.f32.mrf.mxu0
      %v1334 = vadd.f32 %v1285, %v1333
      %1335 = vmatmul.bf16.gmra.mxu0 %v635
      %v1336 = vpop.f32.mrf.mxu0
      %v1337 = vadd.f32 %v1288, %v1336
      %v1338 = vpop.f32.mrf.mxu0
      %v1339 = vadd.f32 %v1290, %v1338
      %1340 = vmatmul.bf16.gmra.mxu0 %v643
      %v1341 = vpop.f32.mrf.mxu0
      %v1342 = vadd.f32 %v1293, %v1341
      %v1343 = vpop.f32.mrf.mxu0
      %v1344 = vadd.f32 %v1295, %v1343
      %1345 = vmatmul.bf16.gmra.mxu0 %v651
      %v1346 = vpop.f32.mrf.mxu0
      %v1347 = vadd.f32 %v1298, %v1346
      %v1348 = vpop.f32.mrf.mxu0
      %v1349 = vadd.f32 %v1300, %v1348
      %1350 = vmatmul.bf16.gmra.mxu0 %v659
      %v1351 = vpop.f32.mrf.mxu0
      %v1352 = vadd.f32 %v1303, %v1351
      %v1353 = vpop.f32.mrf.mxu0
      %v1354 = vadd.f32 %v1305, %v1353
      %1355 = vdwg.mxu0
      %1356 = vmatpush.bf16.msra.mxu0 %v1030
      %1357 = vmatpush.bf16.msra.mxu0 %v1029
      %1358 = vmatpush.bf16.msra.mxu0 %v1028
      %1359 = vmatpush.bf16.msra.mxu0 %v1027
      %1360 = vmatpush.bf16.msra.mxu0 %v1026
      %1361 = vmatpush.bf16.msra.mxu0 %v1025
      %1362 = vmatpush.bf16.msra.mxu0 %v1024
      %1363 = vmatpush.bf16.msra.mxu0 %v1023
      %1364 = vmatmul.bf16.gmra.mxu0 %v604
      %v1365 = vpop.f32.mrf.mxu0
      %v1366 = vadd.f32 %v1317, %v1365
      %v1367 = vpop.f32.mrf.mxu0
      %v1368 = vadd.f32 %v1319, %v1367
      %1369 = vmatmul.bf16.gmra.mxu0 %v612
      %v1370 = vpop.f32.mrf.mxu0
      %v1371 = vadd.f32 %v1322, %v1370
      %v1372 = vpop.f32.mrf.mxu0
      %v1373 = vadd.f32 %v1324, %v1372
      %1374 = vmatmul.bf16.gmra.mxu0 %v620
      %v1375 = vpop.f32.mrf.mxu0
      %v1376 = vadd.f32 %v1327, %v1375
      %v1377 = vpop.f32.mrf.mxu0
      %v1378 = vadd.f32 %v1329, %v1377
      %1379 = vmatmul.bf16.gmra.mxu0 %v628
      %v1380 = vpop.f32.mrf.mxu0
      %v1381 = vadd.f32 %v1332, %v1380
      %v1382 = vpop.f32.mrf.mxu0
      %v1383 = vadd.f32 %v1334, %v1382
      %1384 = vmatmul.bf16.gmra.mxu0 %v636
      %v1385 = vpop.f32.mrf.mxu0
      %v1386 = vadd.f32 %v1337, %v1385
      %v1387 = vpop.f32.mrf.mxu0
      %v1388 = vadd.f32 %v1339, %v1387
      %1389 = vmatmul.bf16.gmra.mxu0 %v644
      %v1390 = vpop.f32.mrf.mxu0
      %v1391 = vadd.f32 %v1342, %v1390
      %v1392 = vpop.f32.mrf.mxu0
      %v1393 = vadd.f32 %v1344, %v1392
      %1394 = vmatmul.bf16.gmra.mxu0 %v652
      %v1395 = vpop.f32.mrf.mxu0
      %v1396 = vadd.f32 %v1347, %v1395
      %v1397 = vpop.f32.mrf.mxu0
      %v1398 = vadd.f32 %v1349, %v1397
      %1399 = vmatmul.bf16.gmra.mxu0 %v660
      %v1400 = vpop.f32.mrf.mxu0
      %v1401 = vadd.f32 %v1352, %v1400
      %v1402 = vpop.f32.mrf.mxu0
      %v1403 = vadd.f32 %v1354, %v1402
      %1404 = vdwg.mxu0
      %1405 = vmatpush.bf16.msra.mxu0 %v1038
      %1406 = vmatpush.bf16.msra.mxu0 %v1037
      %1407 = vmatpush.bf16.msra.mxu0 %v1036
      %1408 = vmatpush.bf16.msra.mxu0 %v1035
      %1409 = vmatpush.bf16.msra.mxu0 %v1034
      %1410 = vmatpush.bf16.msra.mxu0 %v1033
      %1411 = vmatpush.bf16.msra.mxu0 %v1032
      %1412 = vmatpush.bf16.msra.mxu0 %v1031
      %1413 = vmatmul.bf16.gmra.mxu0 %v605
      %v1414 = vpop.f32.mrf.mxu0
      %v1415 = vadd.f32 %v1366, %v1414
      %v1416 = vpop.f32.mrf.mxu0
      %v1417 = vadd.f32 %v1368, %v1416
      %1418 = vmatmul.bf16.gmra.mxu0 %v613
      %v1419 = vpop.f32.mrf.mxu0
      %v1420 = vadd.f32 %v1371, %v1419
      %v1421 = vpop.f32.mrf.mxu0
      %v1422 = vadd.f32 %v1373, %v1421
      %1423 = vmatmul.bf16.gmra.mxu0 %v621
      %v1424 = vpop.f32.mrf.mxu0
      %v1425 = vadd.f32 %v1376, %v1424
      %v1426 = vpop.f32.mrf.mxu0
      %v1427 = vadd.f32 %v1378, %v1426
      %1428 = vmatmul.bf16.gmra.mxu0 %v629
      %v1429 = vpop.f32.mrf.mxu0
      %v1430 = vadd.f32 %v1381, %v1429
      %v1431 = vpop.f32.mrf.mxu0
      %v1432 = vadd.f32 %v1383, %v1431
      %1433 = vmatmul.bf16.gmra.mxu0 %v637
      %v1434 = vpop.f32.mrf.mxu0
      %v1435 = vadd.f32 %v1386, %v1434
      %v1436 = vpop.f32.mrf.mxu0
      %v1437 = vadd.f32 %v1388, %v1436
      %1438 = vmatmul.bf16.gmra.mxu0 %v645
      %v1439 = vpop.f32.mrf.mxu0
      %v1440 = vadd.f32 %v1391, %v1439
      %v1441 = vpop.f32.mrf.mxu0
      %v1442 = vadd.f32 %v1393, %v1441
      %1443 = vmatmul.bf16.gmra.mxu0 %v653
      %v1444 = vpop.f32.mrf.mxu0
      %v1445 = vadd.f32 %v1396, %v1444
      %v1446 = vpop.f32.mrf.mxu0
      %v1447 = vadd.f32 %v1398, %v1446
      %1448 = vmatmul.bf16.gmra.mxu0 %v661
      %v1449 = vpop.f32.mrf.mxu0
      %v1450 = vadd.f32 %v1401, %v1449
      %v1451 = vpop.f32.mrf.mxu0
      %v1452 = vadd.f32 %v1403, %v1451
      %1453 = vdwg.mxu0
      %1454 = vmatpush.bf16.msra.mxu0 %v1046
      %1455 = vmatpush.bf16.msra.mxu0 %v1045
      %1456 = vmatpush.bf16.msra.mxu0 %v1044
      %1457 = vmatpush.bf16.msra.mxu0 %v1043
      %1458 = vmatpush.bf16.msra.mxu0 %v1042
      %1459 = vmatpush.bf16.msra.mxu0 %v1041
      %1460 = vmatpush.bf16.msra.mxu0 %v1040
      %1461 = vmatpush.bf16.msra.mxu0 %v1039
      %1462 = vmatmul.bf16.gmra.mxu0 %v606
      %v1463 = vpop.f32.mrf.mxu0
      %v1464 = vadd.f32 %v1415, %v1463
      %v1465 = vpop.f32.mrf.mxu0
      %v1466 = vadd.f32 %v1417, %v1465
      %1467 = vmatmul.bf16.gmra.mxu0 %v614
      %v1468 = vpop.f32.mrf.mxu0
      %v1469 = vadd.f32 %v1420, %v1468
      %v1470 = vpop.f32.mrf.mxu0
      %v1471 = vadd.f32 %v1422, %v1470
      %1472 = vmatmul.bf16.gmra.mxu0 %v622
      %v1473 = vpop.f32.mrf.mxu0
      %v1474 = vadd.f32 %v1425, %v1473
      %v1475 = vpop.f32.mrf.mxu0
      %v1476 = vadd.f32 %v1427, %v1475
      %1477 = vmatmul.bf16.gmra.mxu0 %v630
      %v1478 = vpop.f32.mrf.mxu0
      %v1479 = vadd.f32 %v1430, %v1478
      %v1480 = vpop.f32.mrf.mxu0
      %v1481 = vadd.f32 %v1432, %v1480
      %1482 = vmatmul.bf16.gmra.mxu0 %v638
      %v1483 = vpop.f32.mrf.mxu0
      %v1484 = vadd.f32 %v1435, %v1483
      %v1485 = vpop.f32.mrf.mxu0
      %v1486 = vadd.f32 %v1437, %v1485
      %1487 = vmatmul.bf16.gmra.mxu0 %v646
      %v1488 = vpop.f32.mrf.mxu0
      %v1489 = vadd.f32 %v1440, %v1488
      %v1490 = vpop.f32.mrf.mxu0
      %v1491 = vadd.f32 %v1442, %v1490
      %1492 = vmatmul.bf16.gmra.mxu0 %v654
      %v1493 = vpop.f32.mrf.mxu0
      %v1494 = vadd.f32 %v1445, %v1493
      %v1495 = vpop.f32.mrf.mxu0
      %v1496 = vadd.f32 %v1447, %v1495
      %1497 = vmatmul.bf16.gmra.mxu0 %v662
      %v1498 = vpop.f32.mrf.mxu0
      %v1499 = vadd.f32 %v1450, %v1498
      %v1500 = vpop.f32.mrf.mxu0
      %v1501 = vadd.f32 %v1452, %v1500
      %1502 = vdwg.mxu0
      %v1503 = vtanh.pop %v1464
      %v1504 = vtanh.pop %v1466
      %v1505 = vtanh.pop %v1469
      %v1506 = vtanh.pop %v1471
      %v1507 = vtanh.pop %v1474
      %v1508 = vtanh.pop %v1476
      %v1509 = vtanh.pop %v1479
      %v1510 = vtanh.pop %v1481
      %v1511 = vtanh.pop %v1484
      %v1512 = vtanh.pop %v1486
      %v1513 = vtanh.pop %v1489
      %v1514 = vtanh.pop %v1491
      %v1515 = vtanh.pop %v1494
      %v1516 = vtanh.pop %v1496
      %v1517 = vtanh.pop %v1499
      %v1518 = vtanh.pop %v1501
      %vm1519 = vcmask 261120
      %1520 = vst.msk [vmem:[%s197] sm:$0xff] %vm1519, %v1503
      %1521 = vst.msk [vmem:[%s197 + $0x8] sm:$0xff] %vm1519, %v1504
      %1522 = vst.msk [vmem:[%s197 + $0x10] sm:$0xff] %vm1519, %v1505
      %1523 = vst.msk [vmem:[%s197 + $0x18] sm:$0xff] %vm1519, %v1506
      %1524 = vst.msk [vmem:[%s197 + $0x20] sm:$0xff] %vm1519, %v1507
      %1525 = vst.msk [vmem:[%s197 + $0x28] sm:$0xff] %vm1519, %v1508
      %1526 = vst.msk [vmem:[%s197 + $0x30] sm:$0xff] %vm1519, %v1509
      %1527 = vst.msk [vmem:[%s197 + $0x38] sm:$0xff] %vm1519, %v1510
      %1528 = vst.msk [vmem:[%s197 + $0x40] sm:$0xff] %vm1519, %v1511
      %1529 = vst.msk [vmem:[%s197 + $0x48] sm:$0xff] %vm1519, %v1512
      %1530 = vst.msk [vmem:[%s197 + $0x50] sm:$0xff] %vm1519, %v1513
      %1531 = vst.msk [vmem:[%s197 + $0x58] sm:$0xff] %vm1519, %v1514
      %1532 = vst.msk [vmem:[%s197 + $0x60] sm:$0xff] %vm1519, %v1515
      %1533 = vst.msk [vmem:[%s197 + $0x68] sm:$0xff] %vm1519, %v1516
      %1534 = vst.msk [vmem:[%s197 + $0x70] sm:$0xff] %vm1519, %v1517
      %1535 = vst.msk [vmem:[%s197 + $0x78] sm:$0xff] %vm1519, %v1518
      %s1536 = smul.u32 16, %s14
      %p1537 = scmp.lt.s32.totalorder %s1536, 31
      %s1538 = scalar_select %p1537, %s1536, 31
      %s1539 = smul.addr %s1538, 8
      %s1540 = scalar_lea.vmem %s3, %s1539
      // Predicated region
      $region33: #{network_forward.2} parent=31 // pred_check
        %p1541 = pneg %p105
      $region34: #{network_forward.2} parent=31 // pred_check_branch
        %1543 = sbr.rel (%p1541) target = $region36
      $region35: #{network_forward.2} parent=31 // pred_region
        %s1544 = smul.u32 16, %s14
      $region36: #{network_forward.2} parent=31 // pred_fallthru
        _
    $region32: #{network_forward.2} parent=5 // pred_fallthru
      _
    %p1545 = scmp.le.s32.totalorder 2, %s9
    // Predicated region
    $region37: #{network_forward.2} parent=5 // pred_check
      %p1546 = pneg %p1545
    $region38: #{network_forward.2} parent=5 // pred_check_branch
      %1548 = sbr.rel (%p1546) target = $region40
    $region39: #{network_forward.2} parent=5 // pred_region
      %s1549 = ssub.s32 %s9, 2
      // Predicated region
      $region41: #{network_forward.2} parent=39 // pred_check
        %p1550 = pneg %p111
      $region42: #{network_forward.2} parent=39 // pred_check_branch
        %1552 = sbr.rel (%p1550) target = $region44
      $region43: #{network_forward.2} parent=39 // pred_region
        %s1553 = smul.u32 16, %s15
        %p1554 = scmp.lt.s32.totalorder %s1553, 31
        %s1555 = scalar_select %p1554, %s1553, 31
        %s1556 = smul.addr %s1555, 8
        %s1557 = scalar_lea.vmem %s3, %s1556
      $region44: #{network_forward.2} parent=39 // pred_fallthru
        _
    $region40: #{network_forward.2} parent=5 // pred_fallthru
      _
  $region6: #{network_forward.2} parent=0 // loop_footer
    %s13 = sadd.s32 1, %s9
  $region7: #{network_forward.2} parent=0 // loop_footer_branch
    %8 = sbr.rel target = $region3
  $region8: #{network_forward.2} parent=0 // loop_exit
    _

// kernel: network_forward.3
$region0: #{network_forward.3}
  #allocation0 [shape = 'u32[]', space=smem, size = 0x4, offset = 0x4, fixed_abs, tag = 'smem constant byte address 0x4 - core index']
  #allocation1 [shape = 'u32[72,128]{1,0:T(1,128)}', space=vmem, size = 0x9000, scoped, tag = 'internal scratch']
  %s0 = inlined_call_operand.vmem [shape: bf16[256,1024], index: 0, kind: input, shape index: {}]
  %s1 = inlined_call_operand.vmem [shape: bf16[512,32], index: 1, kind: input, shape index: {}]
  %s2 = inlined_call_operand.vmem [shape: f32[1,32], index: 2, kind: input, shape index: {}]
  %s3 = inlined_call_operand.vmem [shape: f32[256,32], index: 3, kind: output, shape index: {}]
  %s4 = sld [smem:[#allocation0]]
  $region68: #{network_forward.3} parent=0
    _
  %s6 = ssub.s32 1, %s4
  %s7 = scalar_select 0, %s6, %s4
  $region1: #{network_forward.3} parent=0
    #allocation2 [shape = 'u8[262144]{0}', space=vmem, size = 0x40000, scoped, tag = 'input window, operand 0']
    loop: start=0, step=1, limit=4
    $region2: #{network_forward.3} parent=1 // loop_pre_header
      _
    $region3: #{network_forward.3} parent=1 // loop_header
      %s9 = sphi 0, %s13
      %p10 = scmp.ge.s32.totalorder %s9, 4
      %s19 = sphi 0, %s21
      %s22 = sphi 0, %s19
      %s23 = sphi 0, %s22
      %s39 = sphi 0, %s23
      %s43 = sphi 0, %s43
      %s45 = sphi 0, %s43
      %s46 = sphi 0, %s45
      %s60 = sphi 0, %s46
      %s64 = sphi 0, %s64
      %s66 = sphi 0, %s64
      %s67 = sphi 0, %s66
      %s81 = sphi 0, %s67
      %s87 = sphi 0, %s89
      %s90 = sphi 0, %s87
      %s91 = sphi 0, %s90
      %s107 = sphi 0, %s91
    $region4: #{network_forward.3} parent=1 // loop_header_branch
      %12 = sbr.rel (%p10) target = $region8
    $region5: #{network_forward.3} parent=1 // loop_body
      %s14 = ssub.s32 %s9, 1
      %s15 = ssub.s32 %s9, 2
      %s16 = sadd.s32 %s9, 1
      %s17 = ssub.s32 %s9, %s16
      %p18 = scmp.eq.s32.totalorder %s17, 0
      %s20 = sadd.s32 %s19, 1
      %s21 = scalar_select %p18, %s19, %s20
      %p24 = pneg %p18
      %p25 = scmp.eq.s32.totalorder %s9, 1
      %p26 = por %p24, %p25
      %p27 = scmp.ne.s32.totalorder %s19, %s22
      %p28 = scmp.eq.s32.totalorder %s9, 0
      %p29 = por %p27, %p28
      %p30 = scmp.ne.s32.totalorder %s19, %s22
      %p31 = scmp.eq.s32.totalorder %s14, 1
      %p32 = por %p30, %p31
      %p33 = scmp.ne.s32.totalorder %s22, %s23
      %p34 = scmp.eq.s32.totalorder %s14, 0
      %p35 = por %p33, %p34
      %p36 = scmp.ne.s32.totalorder %s22, %s23
      %p37 = scmp.eq.s32.totalorder %s15, 1
      %p38 = por %p36, %p37
      %p40 = scmp.ne.s32.totalorder %s23, %s39
      %p41 = scmp.eq.s32.totalorder %s15, 0
      %p42 = por %p40, %p41
      %s44 = sadd.s32 %s43, 1
      %p47 = scmp.eq.s32.totalorder %s9, 1
      %p48 = scmp.ne.s32.totalorder %s43, %s45
      %p49 = scmp.eq.s32.totalorder %s9, 0
      %p50 = por %p48, %p49
      %p51 = scmp.ne.s32.totalorder %s43, %s45
      %p52 = scmp.eq.s32.totalorder %s14, 1
      %p53 = por %p51, %p52
      %p54 = scmp.ne.s32.totalorder %s45, %s46
      %p55 = scmp.eq.s32.totalorder %s14, 0
      %p56 = por %p54, %p55
      %p57 = scmp.ne.s32.totalorder %s45, %s46
      %p58 = scmp.eq.s32.totalorder %s15, 1
      %p59 = por %p57, %p58
      %p61 = scmp.ne.s32.totalorder %s46, %s60
      %p62 = scmp.eq.s32.totalorder %s15, 0
      %p63 = por %p61, %p62
      %s65 = sadd.s32 %s64, 1
      %p68 = scmp.eq.s32.totalorder %s9, 1
      %p69 = scmp.ne.s32.totalorder %s64, %s66
      %p70 = scmp.eq.s32.totalorder %s9, 0
      %p71 = por %p69, %p70
      %p72 = scmp.ne.s32.totalorder %s64, %s66
      %p73 = scmp.eq.s32.totalorder %s14, 1
      %p74 = por %p72, %p73
      %p75 = scmp.ne.s32.totalorder %s66, %s67
      %p76 = scmp.eq.s32.totalorder %s14, 0
      %p77 = por %p75, %p76
      %p78 = scmp.ne.s32.totalorder %s66, %s67
      %p79 = scmp.eq.s32.totalorder %s15, 1
      %p80 = por %p78, %p79
      %p82 = scmp.ne.s32.totalorder %s67, %s81
      %p83 = scmp.eq.s32.totalorder %s15, 0
      %p84 = por %p82, %p83
      %s85 = ssub.s32 %s9, %s16
      %p86 = scmp.eq.s32.totalorder %s85, 0
      %s88 = sadd.s32 %s87, 1
      %s89 = scalar_select %p86, %s87, %s88
      %p92 = pneg %p86
      %p93 = scmp.eq.s32.totalorder %s9, 1
      %p94 = por %p92, %p93
      %p95 = scmp.ne.s32.totalorder %s87, %s90
      %p96 = scmp.eq.s32.totalorder %s9, 0
      %p97 = por %p95, %p96
      %p98 = scmp.ne.s32.totalorder %s87, %s90
      %p99 = scmp.eq.s32.totalorder %s14, 1
      %p100 = por %p98, %p99
      %p101 = scmp.ne.s32.totalorder %s90, %s91
      %p102 = scmp.eq.s32.totalorder %s14, 0
      %p103 = por %p101, %p102
      %p104 = scmp.ne.s32.totalorder %s90, %s91
      %p105 = scmp.eq.s32.totalorder %s15, 1
      %p106 = por %p104, %p105
      %p108 = scmp.ne.s32.totalorder %s91, %s107
      %p109 = scmp.eq.s32.totalorder %s15, 0
      %p110 = por %p108, %p109
      %p111 = scmp.le.s32.totalorder 1, %s9
      %p112 = scmp.lt.s32.totalorder %s9, 3
      %p113 = pnand %p111, %p112
      %p114 = pneg %p113
      // Predicated region
      $region9: #{network_forward.3} parent=5 // pred_check
        _
      $region10: #{network_forward.3} parent=5 // pred_check_branch
        %116 = sbr.rel (%p113) target = $region12
      $region11: #{network_forward.3} parent=5 // pred_region
        %s117 = ssub.s32 %s9, 1
        // Predicated region
        $region13: #{network_forward.3} parent=11 // pred_check
          %p118 = pneg %p56
        $region14: #{network_forward.3} parent=11 // pred_check_branch
          %120 = sbr.rel (%p118) target = $region16
        $region15: #{network_forward.3} parent=11 // pred_region
          _
        $region16: #{network_forward.3} parent=11 // pred_fallthru
          _
        // Predicated region
        $region17: #{network_forward.3} parent=11 // pred_check
          %p121 = pneg %p77
        $region18: #{network_forward.3} parent=11 // pred_check_branch
          %123 = sbr.rel (%p121) target = $region20
        $region19: #{network_forward.3} parent=11 // pred_region
          _
        $region20: #{network_forward.3} parent=11 // pred_fallthru
          _
      $region12: #{network_forward.3} parent=5 // pred_fallthru
        _
      %p124 = scmp.lt.s32.totalorder %s9, 2
      // Predicated region
      $region21: #{network_forward.3} parent=5 // pred_check
        %p125 = pneg %p124
      $region22: #{network_forward.3} parent=5 // pred_check_branch
        %127 = sbr.rel (%p125) target = $region24
      $region23: #{network_forward.3} parent=5 // pred_region
        // Predicated region
        $region25: #{network_forward.3} parent=23 // pred_check
          %p128 = pneg %p29
        $region26: #{network_forward.3} parent=23 // pred_check_branch
          %130 = sbr.rel (%p128) target = $region28
        $region27: #{network_forward.3} parent=23 // pred_region
          %s131 = sand.u32 %s19, 1
          %s132 = sand.u32 %s19, 1
          %s133 = smul.addr %s132, 256
          %s134 = scalar_lea.vmem [#allocation2], %s133
          %s135 = smul.u32 16, %s9
          %s136 = smul.addr %s135, 8
          %s137 = smul.addr %s136, 4
          %s138 = scalar_lea.vmem %s0, %s137
          // Predicated region
          $region29: #{network_forward.3} parent=27 // pred_check
            _
          $region30: #{network_forward.3} parent=27 // pred_check_branch
            %140 = sbr.rel (0) target = $region32
          $region31: #{network_forward.3} parent=27 // pred_region
            // Predicated region
            $region33: #{network_forward.3} parent=31 // pred_check
              _
            $region34: #{network_forward.3} parent=31 // pred_check_branch
              %142 = sbr.rel (0) target = $region36
            $region35: #{network_forward.3} parent=31 // pred_region
              loop: start=0, step=1, limit=1
              $region37: #{network_forward.3} parent=35 // loop_pre_header
                _
              $region38: #{network_forward.3} parent=35 // loop_header
                %s144 = sphi 0, %s148
                %p145 = scmp.ge.s32.totalorder %s144, 1
                %s149 = sphi %s138, %s138
                %s150 = sphi %s134, %s134
              $region39: #{network_forward.3} parent=35 // loop_header_branch
                %147 = sbr.rel (%p145) target = $region43
              $region40: #{network_forward.3} parent=35 // loop_body
                %v151 = vld [vmem:[%s149] sm:$0xff]
                %152 = vst [vmem:[%s150] sm:$0xff] %v151
                %v153 = vld [vmem:[%s149 + $0x8] sm:$0xff]
                %154 = vst [vmem:[%s150 + $0x8] sm:$0xff] %v153
                %v155 = vld [vmem:[%s149 + $0x20] sm:$0xff]
                %156 = vst [vmem:[%s150 + $0x10] sm:$0xff] %v155
                %v157 = vld [vmem:[%s149 + $0x28] sm:$0xff]
                %158 = vst [vmem:[%s150 + $0x18] sm:$0xff] %v157
                %v159 = vld [vmem:[%s149 + $0x40] sm:$0xff]
                %160 = vst [vmem:[%s150 + $0x20] sm:$0xff] %v159
                %v161 = vld [vmem:[%s149 + $0x48] sm:$0xff]
                %162 = vst [vmem:[%s150 + $0x28] sm:$0xff] %v161
                %v163 = vld [vmem:[%s149 + $0x60] sm:$0xff]
                %164 = vst [vmem:[%s150 + $0x30] sm:$0xff] %v163
                %v165 = vld [vmem:[%s149 + $0x68] sm:$0xff]
                %166 = vst [vmem:[%s150 + $0x38] sm:$0xff] %v165
                %v167 = vld [vmem:[%s149 + $0x80] sm:$0xff]
                %168 = vst [vmem:[%s150 + $0x40] sm:$0xff] %v167
                %v169 = vld [vmem:[%s149 + $0x88] sm:$0xff]
                %170 = vst [vmem:[%s150 + $0x48] sm:$0xff] %v169
                %v171 = vld [vmem:[%s149 + $0xa0] sm:$0xff]
                %172 = vst [vmem:[%s150 + $0x50] sm:$0xff] %v171
                %v173 = vld [vmem:[%s149 + $0xa8] sm:$0xff]
                %174 = vst [vmem:[%s150 + $0x58] sm:$0xff] %v173
                %v175 = vld [vmem:[%s149 + $0xc0] sm:$0xff]
                %176 = vst [vmem:[%s150 + $0x60] sm:$0xff] %v175
                %v177 = vld [vmem:[%s149 + $0xc8] sm:$0xff]
                %178 = vst [vmem:[%s150 + $0x68] sm:$0xff] %v177
                %v179 = vld [vmem:[%s149 + $0xe0] sm:$0xff]
                %180 = vst [vmem:[%s150 + $0x70] sm:$0xff] %v179
                %v181 = vld [vmem:[%s149 + $0xe8] sm:$0xff]
                %182 = vst [vmem:[%s150 + $0x78] sm:$0xff] %v181
                %v183 = vld [vmem:[%s149 + $0x100] sm:$0xff]
                %184 = vst [vmem:[%s150 + $0x80] sm:$0xff] %v183
                %v185 = vld [vmem:[%s149 + $0x108] sm:$0xff]
                %186 = vst [vmem:[%s150 + $0x88] sm:$0xff] %v185
                %v187 = vld [vmem:[%s149 + $0x120] sm:$0xff]
                %188 = vst [vmem:[%s150 + $0x90] sm:$0xff] %v187
                %v189 = vld [vmem:[%s149 + $0x128] sm:$0xff]
                %190 = vst [vmem:[%s150 + $0x98] sm:$0xff] %v189
                %v191 = vld [vmem:[%s149 + $0x140] sm:$0xff]
                %192 = vst [vmem:[%s150 + $0xa0] sm:$0xff] %v191
                %v193 = vld [vmem:[%s149 + $0x148] sm:$0xff]
                %194 = vst [vmem:[%s150 + $0xa8] sm:$0xff] %v193
                %v195 = vld [vmem:[%s149 + $0x160] sm:$0xff]
                %196 = vst [vmem:[%s150 + $0xb0] sm:$0xff] %v195
                %v197 = vld [vmem:[%s149 + $0x168] sm:$0xff]
                %198 = vst [vmem:[%s150 + $0xb8] sm:$0xff] %v197
                %v199 = vld [vmem:[%s149 + $0x180] sm:$0xff]
                %200 = vst [vmem:[%s150 + $0xc0] sm:$0xff] %v199
                %v201 = vld [vmem:[%s149 + $0x188] sm:$0xff]
                %202 = vst [vmem:[%s150 + $0xc8] sm:$0xff] %v201
                %v203 = vld [vmem:[%s149 + $0x1a0] sm:$0xff]
                %204 = vst [vmem:[%s150 + $0xd0] sm:$0xff] %v203
                %v205 = vld [vmem:[%s149 + $0x1a8] sm:$0xff]
                %206 = vst [vmem:[%s150 + $0xd8] sm:$0xff] %v205
                %v207 = vld [vmem:[%s149 + $0x1c0] sm:$0xff]
                %208 = vst [vmem:[%s150 + $0xe0] sm:$0xff] %v207
                %v209 = vld [vmem:[%s149 + $0x1c8] sm:$0xff]
                %210 = vst [vmem:[%s150 + $0xe8] sm:$0xff] %v209
                %v211 = vld [vmem:[%s149 + $0x1e0] sm:$0xff]
                %212 = vst [vmem:[%s150 + $0xf0] sm:$0xff] %v211
                %v213 = vld [vmem:[%s149 + $0x1e8] sm:$0xff]
                %214 = vst [vmem:[%s150 + $0xf8] sm:$0xff] %v213
              $region41: #{network_forward.3} parent=35 // loop_footer
                %s148 = sadd.s32 1, %s144
              $region42: #{network_forward.3} parent=35 // loop_footer_branch
                %143 = sbr.rel target = $region38
              $region43: #{network_forward.3} parent=35 // loop_exit
                _
            $region36: #{network_forward.3} parent=31 // pred_fallthru
              _
            // Predicated region
            $region44: #{network_forward.3} parent=31 // pred_check
              _
            $region45: #{network_forward.3} parent=31 // pred_check_branch
              %216 = sbr.rel target = $region47
            $region46: #{network_forward.3} parent=31 // pred_region
              _
            $region47: #{network_forward.3} parent=31 // pred_fallthru
              _
          $region32: #{network_forward.3} parent=27 // pred_fallthru
            _
          %217 = vnop
        $region28: #{network_forward.3} parent=23 // pred_fallthru
          _
      $region24: #{network_forward.3} parent=5 // pred_fallthru
        _
      %p218 = scmp.le.s32.totalorder 1, %s9
      %p219 = scmp.lt.s32.totalorder %s9, 3
      %p220 = pnand %p218, %p219
      %p221 = pneg %p220
      // Predicated region
      $region48: #{network_forward.3} parent=5 // pred_check
        _
      $region49: #{network_forward.3} parent=5 // pred_check_branch
        %223 = sbr.rel (%p220) target = $region51
      $region50: #{network_forward.3} parent=5 // pred_region
        %s224 = ssub.s32 %s9, 1
        %s225 = sand.u32 %s22, 1
        %s226 = sand.u32 %s22, 1
        %s227 = smul.addr %s226, 256
        %s228 = scalar_lea.vmem [#allocation2], %s227
        // Predicated region
        $region52: #{network_forward.3} parent=50 // pred_check
          %p229 = pneg %p35
        $region53: #{network_forward.3} parent=50 // pred_check_branch
          %231 = sbr.rel (%p229) target = $region55
        $region54: #{network_forward.3} parent=50 // pred_region
          _
        $region55: #{network_forward.3} parent=50 // pred_fallthru
          _
        %s232 = sand.u32 %s22, 1
        %s233 = sand.u32 %s22, 1
        %s234 = smul.addr %s233, 256
        %s235 = scalar_lea.vmem [#allocation2], %s234
        %p236 = pneg %p35
        %p237 = pneg %p32
        %p238 = pneg %p56
        %p239 = pneg %p53
        %p240 = pneg %p77
        %p241 = pneg %p74
        %p242 = pneg %p103
        %p243 = pneg %p100
        %s244 = smul.u32 16, %s14
        %p245 = scmp.lt.s32.totalorder %s244, 31
        %s246 = scalar_select %p245, %s244, 31
        %s247 = smul.addr %s246, 8
        %s248 = scalar_lea.vmem %s3, %s247
        %s249 = smul.u32 16, %s14
        %s250 = smul.u32 16, %s14
        %p251 = scmp.lt.s32.totalorder %s250, 31
        %s252 = scalar_select %p251, %s250, 31
        %s253 = smul.addr %s252, 8
        %s254 = scalar_lea.vmem %s3, %s253
        %s255 = smul.u32 16, %s14
        %v256 = vld [vmem:[%s228] sm:$0xff]
        %v257 = vld [vmem:[%s228 + $0x8] sm:$0xff]
        %v258 = vld [vmem:[%s228 + $0x10] sm:$0xff]
        %v259 = vld [vmem:[%s228 + $0x18] sm:$0xff]
        %v260 = vld [vmem:[%s228 + $0x20] sm:$0xff]
        %v261 = vld [vmem:[%s228 + $0x28] sm:$0xff]
        %v262 = vld [vmem:[%s228 + $0x30] sm:$0xff]
        %v263 = vld [vmem:[%s228 + $0x38] sm:$0xff]
        %v264 = vld [vmem:[%s228 + $0x40] sm:$0xff]
        %v265 = vld [vmem:[%s228 + $0x48] sm:$0xff]
        %v266 = vld [vmem:[%s228 + $0x50] sm:$0xff]
        %v267 = vld [vmem:[%s228 + $0x58] sm:$0xff]
        %v268 = vld [vmem:[%s228 + $0x60] sm:$0xff]
        %v269 = vld [vmem:[%s228 + $0x68] sm:$0xff]
        %v270 = vld [vmem:[%s228 + $0x70] sm:$0xff]
        %v271 = vld [vmem:[%s228 + $0x78] sm:$0xff]
        %v272 = vld [vmem:[%s228 + $0x80] sm:$0xff]
        %v273 = vld [vmem:[%s228 + $0x88] sm:$0xff]
        %v274 = vld [vmem:[%s228 + $0x90] sm:$0xff]
        %v275 = vld [vmem:[%s228 + $0x98] sm:$0xff]
        %v276 = vld [vmem:[%s228 + $0xa0] sm:$0xff]
        %v277 = vld [vmem:[%s228 + $0xa8] sm:$0xff]
        %v278 = vld [vmem:[%s228 + $0xb0] sm:$0xff]
        %v279 = vld [vmem:[%s228 + $0xb8] sm:$0xff]
        %v280 = vld [vmem:[%s228 + $0xc0] sm:$0xff]
        %v281 = vld [vmem:[%s228 + $0xc8] sm:$0xff]
        %v282 = vld [vmem:[%s228 + $0xd0] sm:$0xff]
        %v283 = vld [vmem:[%s228 + $0xd8] sm:$0xff]
        %v284 = vld [vmem:[%s228 + $0xe0] sm:$0xff]
        %v285 = vld [vmem:[%s228 + $0xe8] sm:$0xff]
        %v286 = vld [vmem:[%s228 + $0xf0] sm:$0xff]
        %v287 = vld [vmem:[%s228 + $0xf8] sm:$0xff]
        %v288 = vld [vmem:[%s1] sm:$0xf]
        %v289 = vld [vmem:[%s1 + $0x4] sm:$0xf]
        %v290 = vld [vmem:[%s1 + $0x8] sm:$0xf]
        %v291 = vld [vmem:[%s1 + $0xc] sm:$0xf]
        %v292 = vld [vmem:[%s1 + $0x10] sm:$0xf]
        %v293 = vld [vmem:[%s1 + $0x14] sm:$0xf]
        %v294 = vld [vmem:[%s1 + $0x18] sm:$0xf]
        %v295 = vld [vmem:[%s1 + $0x1c] sm:$0xf]
        %v296 = vld [vmem:[%s1 + $0x20] sm:$0xf]
        %v297 = vld [vmem:[%s1 + $0x24] sm:$0xf]
        %v298 = vld [vmem:[%s1 + $0x28] sm:$0xf]
        %v299 = vld [vmem:[%s1 + $0x2c] sm:$0xf]
        %v300 = vld [vmem:[%s1 + $0x30] sm:$0xf]
        %v301 = vld [vmem:[%s1 + $0x34] sm:$0xf]
        %v302 = vld [vmem:[%s1 + $0x38] sm:$0xf]
        %v303 = vld [vmem:[%s1 + $0x3c] sm:$0xf]
        %v304 = vld [vmem:[%s1 + $0x40] sm:$0xf]
        %v305 = vld [vmem:[%s1 + $0x44] sm:$0xf]
        %v306 = vld [vmem:[%s1 + $0x48] sm:$0xf]
        %v307 = vld [vmem:[%s1 + $0x4c] sm:$0xf]
        %v308 = vld [vmem:[%s1 + $0x50] sm:$0xf]
        %v309 = vld [vmem:[%s1 + $0x54] sm:$0xf]
        %v310 = vld [vmem:[%s1 + $0x58] sm:$0xf]
        %v311 = vld [vmem:[%s1 + $0x5c] sm:$0xf]
        %v312 = vld [vmem:[%s1 + $0x60] sm:$0xf]
        %v313 = vld [vmem:[%s1 + $0x64] sm:$0xf]
        %v314 = vld [vmem:[%s1 + $0x68] sm:$0xf]
        %v315 = vld [vmem:[%s1 + $0x6c] sm:$0xf]
        %v316 = vld [vmem:[%s1 + $0x70] sm:$0xf]
        %v317 = vld [vmem:[%s1 + $0x74] sm:$0xf]
        %v318 = vld [vmem:[%s1 + $0x78] sm:$0xf]
        %v319 = vld [vmem:[%s1 + $0x7c] sm:$0xf]
        %v320 = vld [vmem:[%s1 + $0x80] sm:$0xf]
        %v321 = vld [vmem:[%s1 + $0x84] sm:$0xf]
        %v322 = vld [vmem:[%s1 + $0x88] sm:$0xf]
        %v323 = vld [vmem:[%s1 + $0x8c] sm:$0xf]
        %v324 = vld [vmem:[%s1 + $0x90] sm:$0xf]
        %v325 = vld [vmem:[%s1 + $0x94] sm:$0xf]
        %v326 = vld [vmem:[%s1 + $0x98] sm:$0xf]
        %v327 = vld [vmem:[%s1 + $0x9c] sm:$0xf]
        %v328 = vld [vmem:[%s1 + $0xa0] sm:$0xf]
        %v329 = vld [vmem:[%s1 + $0xa4] sm:$0xf]
        %v330 = vld [vmem:[%s1 + $0xa8] sm:$0xf]
        %v331 = vld [vmem:[%s1 + $0xac] sm:$0xf]
        %v332 = vld [vmem:[%s1 + $0xb0] sm:$0xf]
        %v333 = vld [vmem:[%s1 + $0xb4] sm:$0xf]
        %v334 = vld [vmem:[%s1 + $0xb8] sm:$0xf]
        %v335 = vld [vmem:[%s1 + $0xbc] sm:$0xf]
        %v336 = vld [vmem:[%s1 + $0xc0] sm:$0xf]
        %v337 = vld [vmem:[%s1 + $0xc4] sm:$0xf]
        %v338 = vld [vmem:[%s1 + $0xc8] sm:$0xf]
        %v339 = vld [vmem:[%s1 + $0xcc] sm:$0xf]
        %v340 = vld [vmem:[%s1 + $0xd0] sm:$0xf]
        %v341 = vld [vmem:[%s1 + $0xd4] sm:$0xf]
        %v342 = vld [vmem:[%s1 + $0xd8] sm:$0xf]
        %v343 = vld [vmem:[%s1 + $0xdc] sm:$0xf]
        %v344 = vld [vmem:[%s1 + $0xe0] sm:$0xf]
        %v345 = vld [vmem:[%s1 + $0xe4] sm:$0xf]
        %v346 = vld [vmem:[%s1 + $0xe8] sm:$0xf]
        %v347 = vld [vmem:[%s1 + $0xec] sm:$0xf]
        %v348 = vld [vmem:[%s1 + $0xf0] sm:$0xf]
        %v349 = vld [vmem:[%s1 + $0xf4] sm:$0xf]
        %v350 = vld [vmem:[%s1 + $0xf8] sm:$0xf]
        %v351 = vld [vmem:[%s1 + $0xfc] sm:$0xf]
        %v352 = vld [vmem:[%s2] sm:$0x1]
        %v354 = vperm.slane %v352, 0
        %v388 = vunpack.c.l.b16 %v256
        %v389 = vunpack.c.h.b16 %v256
        %v390 = vunpack.c.l.b16 %v257
        %v391 = vunpack.c.h.b16 %v257
        %v392 = vunpack.c.l.b16 %v258
        %v393 = vunpack.c.h.b16 %v258
        %v394 = vunpack.c.l.b16 %v259
        %v395 = vunpack.c.h.b16 %v259
        %v396 = vunpack.c.l.b16 %v260
        %v397 = vunpack.c.h.b16 %v260
        %v398 = vunpack.c.l.b16 %v261
        %v399 = vunpack.c.h.b16 %v261
        %v400 = vunpack.c.l.b16 %v262
        %v401 = vunpack.c.h.b16 %v262
        %v402 = vunpack.c.l.b16 %v263
        %v403 = vunpack.c.h.b16 %v263
        %v404 = vunpack.c.l.b16 %v264
        %v405 = vunpack.c.h.b16 %v264
        %v406 = vunpack.c.l.b16 %v265
        %v407 = vunpack.c.h.b16 %v265
        %v408 = vunpack.c.l.b16 %v266
        %v409 = vunpack.c.h.b16 %v266
        %v410 = vunpack.c.l.b16 %v267
        %v411 = vunpack.c.h.b16 %v267
        %v412 = vunpack.c.l.b16 %v268
        %v413 = vunpack.c.h.b16 %v268
        %v414 = vunpack.c.l.b16 %v269
        %v415 = vunpack.c.h.b16 %v269
        %v416 = vunpack.c.l.b16 %v270
        %v417 = vunpack.c.h.b16 %v270
        %v418 = vunpack.c.l.b16 %v271
        %v419 = vunpack.c.h.b16 %v271
        %v420 = vunpack.c.l.b16 %v272
        %v421 = vunpack.c.h.b16 %v272
        %v422 = vunpack.c.l.b16 %v273
        %v423 = vunpack.c.h.b16 %v273
        %v424 = vunpack.c.l.b16 %v274
        %v425 = vunpack.c.h.b16 %v274
        %v426 = vunpack.c.l.b16 %v275
        %v427 = vunpack.c.h.b16 %v275
        %v428 = vunpack.c.l.b16 %v276
        %v429 = vunpack.c.h.b16 %v276
        %v430 = vunpack.c.l.b16 %v277
        %v431 = vunpack.c.h.b16 %v277
        %v432 = vunpack.c.l.b16 %v278
        %v433 = vunpack.c.h.b16 %v278
        %v434 = vunpack.c.l.b16 %v279
        %v435 = vunpack.c.h.b16 %v279
        %v436 = vunpack.c.l.b16 %v280
        %v437 = vunpack.c.h.b16 %v280
        %v438 = vunpack.c.l.b16 %v281
        %v439 = vunpack.c.h.b16 %v281
        %v440 = vunpack.c.l.b16 %v282
        %v441 = vunpack.c.h.b16 %v282
        %v442 = vunpack.c.l.b16 %v283
        %v443 = vunpack.c.h.b16 %v283
        %v444 = vunpack.c.l.b16 %v284
        %v445 = vunpack.c.h.b16 %v284
        %v446 = vunpack.c.l.b16 %v285
        %v447 = vunpack.c.h.b16 %v285
        %v448 = vunpack.c.l.b16 %v286
        %v449 = vunpack.c.h.b16 %v286
        %v450 = vunpack.c.l.b16 %v287
        %v451 = vunpack.c.h.b16 %v287
        %v452 = vpack.c.b16 %v392, %v388
        %v453 = vpack.c.b16 %v393, %v389
        %v454 = vpack.c.b16 %v394, %v390
        %v455 = vpack.c.b16 %v395, %v391
        %v456 = vpack.c.b16 %v400, %v396
        %v457 = vpack.c.b16 %v401, %v397
        %v458 = vpack.c.b16 %v402, %v398
        %v459 = vpack.c.b16 %v403, %v399
        %v460 = vpack.c.b16 %v408, %v404
        %v461 = vpack.c.b16 %v409, %v405
        %v462 = vpack.c.b16 %v410, %v406
        %v463 = vpack.c.b16 %v411, %v407
        %v464 = vpack.c.b16 %v416, %v412
        %v465 = vpack.c.b16 %v417, %v413
        %v466 = vpack.c.b16 %v418, %v414
        %v467 = vpack.c.b16 %v419, %v415
        %v468 = vpack.c.b16 %v424, %v420
        %v469 = vpack.c.b16 %v425, %v421
        %v470 = vpack.c.b16 %v426, %v422
        %v471 = vpack.c.b16 %v427, %v423
        %v472 = vpack.c.b16 %v432, %v428
        %v473 = vpack.c.b16 %v433, %v429
        %v474 = vpack.c.b16 %v434, %v430
        %v475 = vpack.c.b16 %v435, %v431
        %v476 = vpack.c.b16 %v440, %v436
        %v477 = vpack.c.b16 %v441, %v437
        %v478 = vpack.c.b16 %v442, %v438
        %v479 = vpack.c.b16 %v443, %v439
        %v480 = vpack.c.b16 %v448, %v444
        %v481 = vpack.c.b16 %v449, %v445
        %v482 = vpack.c.b16 %v450, %v446
        %v483 = vpack.c.b16 %v451, %v447
        %v580 = vunpack.c.l.b16 %v288
        %v581 = vunpack.c.l.b16 %v289
        %v582 = vunpack.c.l.b16 %v290
        %v583 = vunpack.c.l.b16 %v291
        %v584 = vunpack.c.l.b16 %v292
        %v585 = vunpack.c.l.b16 %v293
        %v586 = vunpack.c.l.b16 %v294
        %v587 = vunpack.c.l.b16 %v295
        %v588 = vunpack.c.l.b16 %v296
        %v589 = vunpack.c.l.b16 %v297
        %v590 = vunpack.c.l.b16 %v298
        %v591 = vunpack.c.l.b16 %v299
        %v592 = vunpack.c.l.b16 %v300
        %v593 = vunpack.c.l.b16 %v301
        %v594 = vunpack.c.l.b16 %v302
        %v595 = vunpack.c.l.b16 %v303
        %v596 = vunpack.c.l.b16 %v304
        %v597 = vunpack.c.l.b16 %v305
        %v598 = vunpack.c.l.b16 %v306
        %v599 = vunpack.c.l.b16 %v307
        %v600 = vunpack.c.l.b16 %v308
        %v601 = vunpack.c.l.b16 %v309
        %v602 = vunpack.c.l.b16 %v310
        %v603 = vunpack.c.l.b16 %v311
        %v604 = vunpack.c.l.b16 %v312
        %v605 = vunpack.c.l.b16 %v313
        %v606 = vunpack.c.l.b16 %v314
        %v607 = vunpack.c.l.b16 %v315
        %v608 = vunpack.c.l.b16 %v316
        %v609 = vunpack.c.l.b16 %v317
        %v610 = vunpack.c.l.b16 %v318
        %v611 = vunpack.c.l.b16 %v319
        %v612 = vunpack.c.l.b16 %v320
        %v613 = vunpack.c.l.b16 %v321
        %v614 = vunpack.c.l.b16 %v322
        %v615 = vunpack.c.l.b16 %v323
        %v616 = vunpack.c.l.b16 %v324
        %v617 = vunpack.c.l.b16 %v325
        %v618 = vunpack.c.l.b16 %v326
        %v619 = vunpack.c.l.b16 %v327
        %v620 = vunpack.c.l.b16 %v328
        %v621 = vunpack.c.l.b16 %v329
        %v622 = vunpack.c.l.b16 %v330
        %v623 = vunpack.c.l.b16 %v331
        %v624 = vunpack.c.l.b16 %v332
        %v625 = vunpack.c.l.b16 %v333
        %v626 = vunpack.c.l.b16 %v334
        %v627 = vunpack.c.l.b16 %v335
        %v628 = vunpack.c.l.b16 %v336
        %v629 = vunpack.c.l.b16 %v337
        %v630 = vunpack.c.l.b16 %v338
        %v631 = vunpack.c.l.b16 %v339
        %v632 = vunpack.c.l.b16 %v340
        %v633 = vunpack.c.l.b16 %v341
        %v634 = vunpack.c.l.b16 %v342
        %v635 = vunpack.c.l.b16 %v343
        %v636 = vunpack.c.l.b16 %v344
        %v637 = vunpack.c.l.b16 %v345
        %v638 = vunpack.c.l.b16 %v346
        %v639 = vunpack.c.l.b16 %v347
        %v640 = vunpack.c.l.b16 %v348
        %v641 = vunpack.c.l.b16 %v349
        %v642 = vunpack.c.l.b16 %v350
        %v643 = vunpack.c.l.b16 %v351
        %v644 = vpack.c.b16 %v581, %v580
        %v645 = vpack.c.b16 %v583, %v582
        %v646 = vpack.c.b16 %v585, %v584
        %v647 = vpack.c.b16 %v587, %v586
        %v648 = vpack.c.b16 %v589, %v588
        %v649 = vpack.c.b16 %v591, %v590
        %v650 = vpack.c.b16 %v593, %v592
        %v651 = vpack.c.b16 %v595, %v594
        %v652 = vpack.c.b16 %v597, %v596
        %v653 = vpack.c.b16 %v599, %v598
        %v654 = vpack.c.b16 %v601, %v600
        %v655 = vpack.c.b16 %v603, %v602
        %v656 = vpack.c.b16 %v605, %v604
        %v657 = vpack.c.b16 %v607, %v606
        %v658 = vpack.c.b16 %v609, %v608
        %v659 = vpack.c.b16 %v611, %v610
        %v660 = vpack.c.b16 %v613, %v612
        %v661 = vpack.c.b16 %v615, %v614
        %v662 = vpack.c.b16 %v617, %v616
        %v663 = vpack.c.b16 %v619, %v618
        %v664 = vpack.c.b16 %v621, %v620
        %v665 = vpack.c.b16 %v623, %v622
        %v666 = vpack.c.b16 %v625, %v624
        %v667 = vpack.c.b16 %v627, %v626
        %v668 = vpack.c.b16 %v629, %v628
        %v669 = vpack.c.b16 %v631, %v630
        %v670 = vpack.c.b16 %v633, %v632
        %v671 = vpack.c.b16 %v635, %v634
        %v672 = vpack.c.b16 %v637, %v636
        %v673 = vpack.c.b16 %v639, %v638
        %v674 = vpack.c.b16 %v641, %v640
        %v675 = vpack.c.b16 %v643, %v642
        %708 = vmatpush.bf16.msra.mxu0 %v651
        %709 = vmatpush.bf16.msra.mxu0 %v650
        %710 = vmatpush.bf16.msra.mxu0 %v649
        %711 = vmatpush.bf16.msra.mxu0 %v648
        %712 = vmatpush.bf16.msra.mxu0 %v647
        %713 = vmatpush.bf16.msra.mxu0 %v646
        %714 = vmatpush.bf16.msra.mxu0 %v645
        %715 = vmatpush.bf16.msra.mxu0 %v644
        %716 = vmatmul.bf16.gmra.mxu0 %v452
        %v717 = vpop.f32.mrf.mxu0
        %v718 = vadd.f32 %v354, %v717
        %v719 = vpop.f32.mrf.mxu0
        %v720 = vadd.f32 %v354, %v719
        %721 = vmatmul.bf16.gmra.mxu0 %v456
        %v722 = vpop.f32.mrf.mxu0
        %v723 = vadd.f32 %v354, %v722
        %v724 = vpop.f32.mrf.mxu0
        %v725 = vadd.f32 %v354, %v724
        %726 = vmatmul.bf16.gmra.mxu0 %v460
        %v727 = vpop.f32.mrf.mxu0
        %v728 = vadd.f32 %v354, %v727
        %v729 = vpop.f32.mrf.mxu0
        %v730 = vadd.f32 %v354, %v729
        %731 = vmatmul.bf16.gmra.mxu0 %v464
        %v732 = vpop.f32.mrf.mxu0
        %v733 = vadd.f32 %v354, %v732
        %v734 = vpop.f32.mrf.mxu0
        %v735 = vadd.f32 %v354, %v734
        %736 = vmatmul.bf16.gmra.mxu0 %v468
        %v737 = vpop.f32.mrf.mxu0
        %v738 = vadd.f32 %v354, %v737
        %v739 = vpop.f32.mrf.mxu0
        %v740 = vadd.f32 %v354, %v739
        %741 = vmatmul.bf16.gmra.mxu0 %v472
        %v742 = vpop.f32.mrf.mxu0
        %v743 = vadd.f32 %v354, %v742
        %v744 = vpop.f32.mrf.mxu0
        %v745 = vadd.f32 %v354, %v744
        %746 = vmatmul.bf16.gmra.mxu0 %v476
        %v747 = vpop.f32.mrf.mxu0
        %v748 = vadd.f32 %v354, %v747
        %v749 = vpop.f32.mrf.mxu0
        %v750 = vadd.f32 %v354, %v749
        %751 = vmatmul.bf16.gmra.mxu0 %v480
        %v752 = vpop.f32.mrf.mxu0
        %v753 = vadd.f32 %v354, %v752
        %v754 = vpop.f32.mrf.mxu0
        %v755 = vadd.f32 %v354, %v754
        %756 = vdwg.mxu0
        %757 = vmatpush.bf16.msra.mxu0 %v659
        %758 = vmatpush.bf16.msra.mxu0 %v658
        %759 = vmatpush.bf16.msra.mxu0 %v657
        %760 = vmatpush.bf16.msra.mxu0 %v656
        %761 = vmatpush.bf16.msra.mxu0 %v655
        %762 = vmatpush.bf16.msra.mxu0 %v654
        %763 = vmatpush.bf16.msra.mxu0 %v653
        %764 = vmatpush.bf16.msra.mxu0 %v652
        %765 = vmatmul.bf16.gmra.mxu0 %v453
        %v766 = vpop.f32.mrf.mxu0
        %v767 = vadd.f32 %v718, %v766
        %v768 = vpop.f32.mrf.mxu0
        %v769 = vadd.f32 %v720, %v768
        %770 = vmatmul.bf16.gmra.mxu0 %v457
        %v771 = vpop.f32.mrf.mxu0
        %v772 = vadd.f32 %v723, %v771
        %v773 = vpop.f32.mrf.mxu0
        %v774 = vadd.f32 %v725, %v773
        %775 = vmatmul.bf16.gmra.mxu0 %v461
        %v776 = vpop.f32.mrf.mxu0
        %v777 = vadd.f32 %v728, %v776
        %v778 = vpop.f32.mrf.mxu0
        %v779 = vadd.f32 %v730, %v778
        %780 = vmatmul.bf16.gmra.mxu0 %v465
        %v781 = vpop.f32.mrf.mxu0
        %v782 = vadd.f32 %v733, %v781
        %v783 = vpop.f32.mrf.mxu0
        %v784 = vadd.f32 %v735, %v783
        %785 = vmatmul.bf16.gmra.mxu0 %v469
        %v786 = vpop.f32.mrf.mxu0
        %v787 = vadd.f32 %v738, %v786
        %v788 = vpop.f32.mrf.mxu0
        %v789 = vadd.f32 %v740, %v788
        %790 = vmatmul.bf16.gmra.mxu0 %v473
        %v791 = vpop.f32.mrf.mxu0
        %v792 = vadd.f32 %v743, %v791
        %v793 = vpop.f32.mrf.mxu0
        %v794 = vadd.f32 %v745, %v793
        %795 = vmatmul.bf16.gmra.mxu0 %v477
        %v796 = vpop.f32.mrf.mxu0
        %v797 = vadd.f32 %v748, %v796
        %v798 = vpop.f32.mrf.mxu0
        %v799 = vadd.f32 %v750, %v798
        %800 = vmatmul.bf16.gmra.mxu0 %v481
        %v801 = vpop.f32.mrf.mxu0
        %v802 = vadd.f32 %v753, %v801
        %v803 = vpop.f32.mrf.mxu0
        %v804 = vadd.f32 %v755, %v803
        %805 = vdwg.mxu0
        %806 = vmatpush.bf16.msra.mxu0 %v667
        %807 = vmatpush.bf16.msra.mxu0 %v666
        %808 = vmatpush.bf16.msra.mxu0 %v665
        %809 = vmatpush.bf16.msra.mxu0 %v664
        %810 = vmatpush.bf16.msra.mxu0 %v663
        %811 = vmatpush.bf16.msra.mxu0 %v662
        %812 = vmatpush.bf16.msra.mxu0 %v661
        %813 = vmatpush.bf16.msra.mxu0 %v660
        %814 = vmatmul.bf16.gmra.mxu0 %v454
        %v815 = vpop.f32.mrf.mxu0
        %v816 = vadd.f32 %v767, %v815
        %v817 = vpop.f32.mrf.mxu0
        %v818 = vadd.f32 %v769, %v817
        %819 = vmatmul.bf16.gmra.mxu0 %v458
        %v820 = vpop.f32.mrf.mxu0
        %v821 = vadd.f32 %v772, %v820
        %v822 = vpop.f32.mrf.mxu0
        %v823 = vadd.f32 %v774, %v822
        %824 = vmatmul.bf16.gmra.mxu0 %v462
        %v825 = vpop.f32.mrf.mxu0
        %v826 = vadd.f32 %v777, %v825
        %v827 = vpop.f32.mrf.mxu0
        %v828 = vadd.f32 %v779, %v827
        %829 = vmatmul.bf16.gmra.mxu0 %v466
        %v830 = vpop.f32.mrf.mxu0
        %v831 = vadd.f32 %v782, %v830
        %v832 = vpop.f32.mrf.mxu0
        %v833 = vadd.f32 %v784, %v832
        %834 = vmatmul.bf16.gmra.mxu0 %v470
        %v835 = vpop.f32.mrf.mxu0
        %v836 = vadd.f32 %v787, %v835
        %v837 = vpop.f32.mrf.mxu0
        %v838 = vadd.f32 %v789, %v837
        %839 = vmatmul.bf16.gmra.mxu0 %v474
        %v840 = vpop.f32.mrf.mxu0
        %v841 = vadd.f32 %v792, %v840
        %v842 = vpop.f32.mrf.mxu0
        %v843 = vadd.f32 %v794, %v842
        %844 = vmatmul.bf16.gmra.mxu0 %v478
        %v845 = vpop.f32.mrf.mxu0
        %v846 = vadd.f32 %v797, %v845
        %v847 = vpop.f32.mrf.mxu0
        %v848 = vadd.f32 %v799, %v847
        %849 = vmatmul.bf16.gmra.mxu0 %v482
        %v850 = vpop.f32.mrf.mxu0
        %v851 = vadd.f32 %v802, %v850
        %v852 = vpop.f32.mrf.mxu0
        %v853 = vadd.f32 %v804, %v852
        %854 = vdwg.mxu0
        %855 = vmatpush.bf16.msra.mxu0 %v675
        %856 = vmatpush.bf16.msra.mxu0 %v674
        %857 = vmatpush.bf16.msra.mxu0 %v673
        %858 = vmatpush.bf16.msra.mxu0 %v672
        %859 = vmatpush.bf16.msra.mxu0 %v671
        %860 = vmatpush.bf16.msra.mxu0 %v670
        %861 = vmatpush.bf16.msra.mxu0 %v669
        %862 = vmatpush.bf16.msra.mxu0 %v668
        %863 = vmatmul.bf16.gmra.mxu0 %v455
        %v864 = vpop.f32.mrf.mxu0
        %v865 = vadd.f32 %v816, %v864
        %v866 = vpop.f32.mrf.mxu0
        %v867 = vadd.f32 %v818, %v866
        %868 = vmatmul.bf16.gmra.mxu0 %v459
        %v869 = vpop.f32.mrf.mxu0
        %v870 = vadd.f32 %v821, %v869
        %v871 = vpop.f32.mrf.mxu0
        %v872 = vadd.f32 %v823, %v871
        %873 = vmatmul.bf16.gmra.mxu0 %v463
        %v874 = vpop.f32.mrf.mxu0
        %v875 = vadd.f32 %v826, %v874
        %v876 = vpop.f32.mrf.mxu0
        %v877 = vadd.f32 %v828, %v876
        %878 = vmatmul.bf16.gmra.mxu0 %v467
        %v879 = vpop.f32.mrf.mxu0
        %v880 = vadd.f32 %v831, %v879
        %v881 = vpop.f32.mrf.mxu0
        %v882 = vadd.f32 %v833, %v881
        %883 = vmatmul.bf16.gmra.mxu0 %v471
        %v884 = vpop.f32.mrf.mxu0
        %v885 = vadd.f32 %v836, %v884
        %v886 = vpop.f32.mrf.mxu0
        %v887 = vadd.f32 %v838, %v886
        %888 = vmatmul.bf16.gmra.mxu0 %v475
        %v889 = vpop.f32.mrf.mxu0
        %v890 = vadd.f32 %v841, %v889
        %v891 = vpop.f32.mrf.mxu0
        %v892 = vadd.f32 %v843, %v891
        %893 = vmatmul.bf16.gmra.mxu0 %v479
        %v894 = vpop.f32.mrf.mxu0
        %v895 = vadd.f32 %v846, %v894
        %v896 = vpop.f32.mrf.mxu0
        %v897 = vadd.f32 %v848, %v896
        %898 = vmatmul.bf16.gmra.mxu0 %v483
        %v899 = vpop.f32.mrf.mxu0
        %v900 = vadd.f32 %v851, %v899
        %v901 = vpop.f32.mrf.mxu0
        %v902 = vadd.f32 %v853, %v901
        %903 = vdwg.mxu0
        %v904 = vtanh.pop %v865
        %v905 = vtanh.pop %v867
        %v906 = vtanh.pop %v870
        %v907 = vtanh.pop %v872
        %v908 = vtanh.pop %v875
        %v909 = vtanh.pop %v877
        %v910 = vtanh.pop %v880
        %v911 = vtanh.pop %v882
        %v912 = vtanh.pop %v885
        %v913 = vtanh.pop %v887
        %v914 = vtanh.pop %v890
        %v915 = vtanh.pop %v892
        %v916 = vtanh.pop %v895
        %v917 = vtanh.pop %v897
        %v918 = vtanh.pop %v900
        %v919 = vtanh.pop %v902
        %vm920 = vcmask 261120
        %921 = vst.msk [vmem:[%s254] sm:$0xff] %vm920, %v904
        %922 = vst.msk [vmem:[%s254 + $0x8] sm:$0xff] %vm920, %v905
        %923 = vst.msk [vmem:[%s254 + $0x10] sm:$0xff] %vm920, %v906
        %924 = vst.msk [vmem:[%s254 + $0x18] sm:$0xff] %vm920, %v907
        %925 = vst.msk [vmem:[%s254 + $0x20] sm:$0xff] %vm920, %v908
        %926 = vst.msk [vmem:[%s254 + $0x28] sm:$0xff] %vm920, %v909
        %927 = vst.msk [vmem:[%s254 + $0x30] sm:$0xff] %vm920, %v910
        %928 = vst.msk [vmem:[%s254 + $0x38] sm:$0xff] %vm920, %v911
        %929 = vst.msk [vmem:[%s254 + $0x40] sm:$0xff] %vm920, %v912
        %930 = vst.msk [vmem:[%s254 + $0x48] sm:$0xff] %vm920, %v913
        %931 = vst.msk [vmem:[%s254 + $0x50] sm:$0xff] %vm920, %v914
        %932 = vst.msk [vmem:[%s254 + $0x58] sm:$0xff] %vm920, %v915
        %933 = vst.msk [vmem:[%s254 + $0x60] sm:$0xff] %vm920, %v916
        %934 = vst.msk [vmem:[%s254 + $0x68] sm:$0xff] %vm920, %v917
        %935 = vst.msk [vmem:[%s254 + $0x70] sm:$0xff] %vm920, %v918
        %936 = vst.msk [vmem:[%s254 + $0x78] sm:$0xff] %vm920, %v919
        %s937 = smul.u32 16, %s14
        %p938 = scmp.lt.s32.totalorder %s937, 31
        %s939 = scalar_select %p938, %s937, 31
        %s940 = smul.addr %s939, 8
        %s941 = scalar_lea.vmem %s3, %s940
        // Predicated region
        $region56: #{network_forward.3} parent=50 // pred_check
          %p942 = pneg %p100
        $region57: #{network_forward.3} parent=50 // pred_check_branch
          %944 = sbr.rel (%p942) target = $region59
        $region58: #{network_forward.3} parent=50 // pred_region
          %s945 = smul.u32 16, %s14
        $region59: #{network_forward.3} parent=50 // pred_fallthru
          _
      $region51: #{network_forward.3} parent=5 // pred_fallthru
        _
      %p946 = scmp.le.s32.totalorder 2, %s9
      // Predicated region
      $region60: #{network_forward.3} parent=5 // pred_check
        %p947 = pneg %p946
      $region61: #{network_forward.3} parent=5 // pred_check_branch
        %949 = sbr.rel (%p947) target = $region63
      $region62: #{network_forward.3} parent=5 // pred_region
        %s950 = ssub.s32 %s9, 2
        // Predicated region
        $region64: #{network_forward.3} parent=62 // pred_check
          %p951 = pneg %p106
        $region65: #{network_forward.3} parent=62 // pred_check_branch
          %953 = sbr.rel (%p951) target = $region67
        $region66: #{network_forward.3} parent=62 // pred_region
          %s954 = smul.u32 16, %s15
          %p955 = scmp.lt.s32.totalorder %s954, 31
          %s956 = scalar_select %p955, %s954, 31
          %s957 = smul.addr %s956, 8
          %s958 = scalar_lea.vmem %s3, %s957
        $region67: #{network_forward.3} parent=62 // pred_fallthru
          _
      $region63: #{network_forward.3} parent=5 // pred_fallthru
        _
    $region6: #{network_forward.3} parent=1 // loop_footer
      %s13 = sadd.s32 1, %s9
    $region7: #{network_forward.3} parent=1 // loop_footer_branch
      %8 = sbr.rel target = $region3
    $region8: #{network_forward.3} parent=1 // loop_exit
      _

</llo_original>
